<compile_context>
chip_gen: v6e
topology: v6e:2x2x1
jax: 0.10.0
libtpu: 0.0.40
codegen_flags: <defaults>
</compile_context>

<pallas_src>
import math
import functools

import jax
import jax.numpy as jnp
from jax.experimental import pallas as pl
from jax.experimental.pallas import tpu as pltpu

_LN_EPS = 1e-5

_PARAM_ORDER = ("ln_w", "ln_b", "wq", "bq", "wk", "bk", "wv", "bv",
                "wo", "bo", "w1", "b1", "w2", "b2")
_BF16_WEIGHTS = frozenset({"wq", "wk", "wv", "wo", "w1", "w2"})


def _encoder_kernel(n_heads,
                    x_full_ref, x_q_ref, ln_w_ref, ln_b_ref,
                    wq_ref, bq_ref, wk_ref, bk_ref, wv_ref, bv_ref,
                    wo_ref, bo_ref, w1_ref, b1_ref, w2_ref, b2_ref,
                    o_ref):
    x_full = x_full_ref[...].astype(jnp.float32)        # (S, D)
    x_q = x_q_ref[...].astype(jnp.float32)              # (TQ, D)
    S, D = x_full.shape
    TQ = x_q.shape[0]
    dh = D // n_heads
    ln_w = ln_w_ref[...]                                 # (1, D) f32
    ln_b = ln_b_ref[...]
    inv_d = 1.0 / D

    def layer_norm(v):
        # Centered (two-pass) variance: robust against cancellation; the cost
        # is negligible next to the MXU matmuls.
        mu = jnp.sum(v, axis=-1, keepdims=True) * inv_d
        c = v - mu
        var = jnp.sum(c * c, axis=-1, keepdims=True) * inv_d
        return c * jax.lax.rsqrt(var + _LN_EPS) * ln_w + ln_b

    def dense(a_bf16, w_ref, b_ref):
        # bf16 x bf16 matmul with f32 accumulation on the MXU.
        return jnp.dot(a_bf16, w_ref[...],
                       preferred_element_type=jnp.float32) + b_ref[...]

    # ---- K / V from the full sequence (attention is all-to-all) ------------
    # TODO(synk): for long sequences, precompute K/V once per batch element in
    # a separate pass (or add a flash-style kv grid axis) instead of
    # recomputing them for every query tile.
    h_full = layer_norm(x_full).astype(jnp.bfloat16)     # (S, D)
    k = dense(h_full, wk_ref, bk_ref).astype(jnp.bfloat16)
    v = dense(h_full, wv_ref, bv_ref).astype(jnp.bfloat16)

    # ---- Q for this query tile (1/sqrt(dh) is pre-folded into wq/bq) -------
    h_q = layer_norm(x_q).astype(jnp.bfloat16)           # (TQ, D)
    q = dense(h_q, wq_ref, bq_ref).astype(jnp.bfloat16)

    # Head split via a single reshape (no per-head lane-narrow slices/stack).
    qh = q.reshape(TQ, n_heads, dh)                      # (TQ, H, dh) bf16
    kh = k.reshape(S, n_heads, dh)                       # (S,  H, dh) bf16
    vh = v.reshape(S, n_heads, dh)

    s = jnp.einsum('qhd,khd->hqk', qh, kh,
                   preferred_element_type=jnp.float32)   # (H, TQ, S) f32
    s = s - jnp.max(s, axis=-1, keepdims=True)           # stable softmax
    # TODO(synk): on v6e/v7x the exp could run in bf16 (bf16 EUP) once S is
    # large enough that softmax competes with the MXU; kept f32 for accuracy.
    p = jnp.exp(s)
    p = p * pl.reciprocal(jnp.sum(p, axis=-1, keepdims=True), approx=True)
    ctx = jnp.einsum('hqk,khd->hqd', p.astype(jnp.bfloat16), vh,
                     preferred_element_type=jnp.float32)  # (H, TQ, dh) f32

    # Merge heads with one transpose + reshape (single relayout, no concat).
    ctx = ctx.astype(jnp.bfloat16).transpose(1, 0, 2).reshape(TQ, D)
    attn = dense(ctx, wo_ref, bo_ref)                    # (TQ, D) f32
    x1 = attn + x_q                                      # residual

    # ---- LN (same params as reference forward) -> MLP -> residual ----------
    h2 = layer_norm(x1).astype(jnp.bfloat16)
    f1 = dense(h2, w1_ref, b1_ref)
    # exact (erf-based) GELU, matching nn.GELU() default
    g = 0.5 * f1 * (1.0 + jax.lax.erf(f1 * (1.0 / math.sqrt(2.0))))
    f2 = dense(g.astype(jnp.bfloat16), w2_ref, b2_ref)
    o_ref[...] = (f2 + x1).astype(o_ref.dtype)


def prepare_params(params, n_heads):
    """One-time conversion of the parameter dict into kernel-ready arrays.

    * six weight matrices -> bf16 (halves HBM->VMEM DMA and VMEM footprint)
    * 1/sqrt(dh) query scale folded into wq / bq (removes an in-kernel mul)
    Call once and reuse across forward calls (avoids per-call astype traffic).
    """
    D = params["wq"].shape[0]
    scale = 1.0 / math.sqrt(D // n_heads)
    # TODO(synk): on v7x, ship the weights as fp8 with per-channel scales to
    # halve weight DMA/VMEM again and double MXU throughput (revalidate acc.).
    p = dict(params)
    p["wq"] = p["wq"] * scale
    p["bq"] = p["bq"] * scale
    out = []
    for name in _PARAM_ORDER:
        a = p[name]
        out.append(a.astype(jnp.bfloat16) if name in _BF16_WEIGHTS
                   else a.astype(jnp.float32))
    return tuple(out)


def _choose_q_tile(S, max_tile=256):
    if S <= max_tile or S % 8 != 0:
        return S
    for t in range(max_tile, 7, -8):
        if S % t == 0:
            return t
    return S


def _vmem_limit_bytes(S, TQ, D, H, x_itemsize, param_bytes):
    # double-buffered activation blocks: x_full + x_q (in) + out
    act = 2 * (S * D + 2 * TQ * D) * x_itemsize
    # f32 scores + exp live simultaneously
    scores = 2 * H * TQ * S * 4
    # bf16 h/k/v full-sequence intermediates + a few (TQ, D) f32 temps
    interm = 3 * S * D * 2 + 6 * TQ * D * 4
    # params counted ONCE: they are single-buffered (pl.Buffered(1))
    needed = act + param_bytes + scores + interm + (8 << 20)  # spill headroom
    try:  # capability probe only (not masking kernel errors)
        cap = int(getattr(pltpu.get_tpu_info(), "vmem_capacity_bytes", 64 << 20))
    except Exception:
        cap = 64 << 20
    # Never ask for the whole part: leave compiler scratch/spill headroom.
    ceiling = cap - max(8 << 20, cap // 8)   # 64 MiB -> 56 MiB, 128 MiB -> 112 MiB
    return int(max(32 << 20, min(ceiling, needed)))


@functools.partial(jax.jit, static_argnames=("n_heads", "q_tile"))
def encoder_forward(x, kernel_args, *, n_heads, q_tile=None):
    B, S, D = x.shape
    TQ = q_tile if q_tile is not None else _choose_q_tile(S)
    assert S % TQ == 0, "query tile must divide the sequence length"
    n_q = S // TQ

    x_full_spec = pl.BlockSpec((pl.Squeezed(), S, D), lambda b, qi: (b, 0, 0))
    x_q_spec = pl.BlockSpec((pl.Squeezed(), TQ, D), lambda b, qi: (b, qi, 0))
    out_spec = pl.BlockSpec((pl.Squeezed(), TQ, D), lambda b, qi: (b, qi, 0))

    def param_spec(a):
        # Grid-invariant parameters: single buffer (double-buffering is waste).
        return pl.BlockSpec(a.shape, lambda b, qi: (0, 0),
                            pipeline_mode=pl.Buffered(1))

    param_bytes = sum(a.size * a.dtype.itemsize for a in kernel_args)
    vmem_limit = _vmem_limit_bytes(S, TQ, D, n_heads, x.dtype.itemsize,
                                   param_bytes)

    return pl.pallas_call(
        functools.partial(_encoder_kernel, n_heads),
        out_shape=jax.ShapeDtypeStruct((B, S, D), x.dtype),
        grid=(B, n_q),
        in_specs=[x_full_spec, x_q_spec] + [param_spec(a) for a in kernel_args],
        out_specs=out_spec,
        compiler_params=pltpu.CompilerParams(
            dimension_semantics=("parallel", "parallel"),
            vmem_limit_bytes=vmem_limit),
    )(x, x, *kernel_args)


def init_params(key, hidden_dim):
    D = hidden_dim
    ks = jax.random.split(key, 6)
    scale = 0.02

    def lin(k):  # (in, out) == pre-transposed nn.Linear weight
        return scale * jax.random.normal(k, (D, D), jnp.float32)

    return {
        "ln_w": jnp.ones((1, D), jnp.float32),
        "ln_b": jnp.zeros((1, D), jnp.float32),
        "wq": lin(ks[0]), "bq": jnp.full((1, D), 0.01, jnp.float32),
        "wk": lin(ks[1]), "bk": jnp.full((1, D), -0.01, jnp.float32),
        "wv": lin(ks[2]), "bv": jnp.full((1, D), 0.02, jnp.float32),
        "wo": lin(ks[3]), "bo": jnp.full((1, D), -0.02, jnp.float32),
        "w1": lin(ks[4]), "b1": jnp.full((1, D), 0.03, jnp.float32),
        "w2": lin(ks[5]), "b2": jnp.full((1, D), -0.03, jnp.float32),
    }


def encoder_ref(x, p, n_heads):
    """Pure-JAX f32 reference mirroring the PyTorch forward (for validation)."""
    B, S, D = x.shape
    dh = D // n_heads
    eps = 1e-5

    def ln(v):
        mu = jnp.mean(v, axis=-1, keepdims=True)
        var = jnp.mean((v - mu) ** 2, axis=-1, keepdims=True)
        return (v - mu) / jnp.sqrt(var + eps) * p["ln_w"] + p["ln_b"]

    res = x
    h = ln(x)
    q = (h @ p["wq"] + p["bq"]).reshape(B, S, n_heads, dh).transpose(0, 2, 1, 3)
    k = (h @ p["wk"] + p["bk"]).reshape(B, S, n_heads, dh).transpose(0, 2, 1, 3)
    v = (h @ p["wv"] + p["bv"]).reshape(B, S, n_heads, dh).transpose(0, 2, 1, 3)
    scores = jax.nn.softmax(q @ k.transpose(0, 1, 3, 2) / math.sqrt(dh), axis=-1)
    ctx = (scores @ v).transpose(0, 2, 1, 3).reshape(B, S, D)
    x1 = ctx @ p["wo"] + p["bo"] + res
    h2 = ln(x1)
    f1 = h2 @ p["w1"] + p["b1"]
    g = 0.5 * f1 * (1.0 + jax.scipy.special.erf(f1 / math.sqrt(2.0)))
    return g @ p["w2"] + p["b2"] + x1


if __name__ == "__main__":
    B, S, D, H = 2, 16, 32, 4          # batch, seq, hidden_dim, n_heads
    key = jax.random.PRNGKey(0)
    kx, kp = jax.random.split(key)
    x = jax.random.normal(kx, (B, S, D), jnp.float32)
    params = init_params(kp, D)

    kernel_args = prepare_params(params, H)   # one-time bf16 cast + scale fold
    # q_tile=8 exercises the query-tiled path: grid = (B, 2), both "parallel".
    out = encoder_forward(x, kernel_args, n_heads=H, q_tile=8)
    out = jax.block_until_ready(out)

    ref = encoder_ref(x, params, H)
    assert out.shape == (B, S, D)
    assert bool(jnp.all(jnp.isfinite(out)))
    assert bool(jnp.allclose(out, ref, atol=2e-2, rtol=2e-2)), "mismatch vs reference"
    print("KERNEL_OK")
</pallas_src>

<mosaic_0001>
module attributes {stable_mosaic.version = 11 : i64} {
  func.func @_encoder_kernel(%arg0: i32, %arg1: i32, %arg2: memref<1x16x32xf32, #tpu.memory_space<vmem>>, %arg3: memref<1x8x32xf32, #tpu.memory_space<vmem>>, %arg4: memref<1x32xf32, #tpu.memory_space<vmem>>, %arg5: memref<1x32xf32, #tpu.memory_space<vmem>>, %arg6: memref<32x32xbf16, #tpu.memory_space<vmem>>, %arg7: memref<1x32xf32, #tpu.memory_space<vmem>>, %arg8: memref<32x32xbf16, #tpu.memory_space<vmem>>, %arg9: memref<1x32xf32, #tpu.memory_space<vmem>>, %arg10: memref<32x32xbf16, #tpu.memory_space<vmem>>, %arg11: memref<1x32xf32, #tpu.memory_space<vmem>>, %arg12: memref<32x32xbf16, #tpu.memory_space<vmem>>, %arg13: memref<1x32xf32, #tpu.memory_space<vmem>>, %arg14: memref<32x32xbf16, #tpu.memory_space<vmem>>, %arg15: memref<1x32xf32, #tpu.memory_space<vmem>>, %arg16: memref<32x32xbf16, #tpu.memory_space<vmem>>, %arg17: memref<1x32xf32, #tpu.memory_space<vmem>>, %arg18: memref<1x8x32xf32, #tpu.memory_space<vmem>>) attributes {dimension_semantics = [#tpu.dimension_semantics<parallel>, #tpu.dimension_semantics<parallel>], iteration_bounds = array<i64: 2, 2>, scalar_prefetch = 0 : i64, scratch_operands = 0 : i64, tpu.core_type = #tpu.core_type<tc>, window_params = [{transform_indices = @transform_0, window_bounds = array<i64: 1, 16, 32>}, {transform_indices = @transform_1, window_bounds = array<i64: 1, 8, 32>}, {pipeline_mode = #tpu.pipeline_mode<synchronous>, transform_indices = @transform_2, window_bounds = array<i64: 1, 32>}, {pipeline_mode = #tpu.pipeline_mode<synchronous>, transform_indices = @transform_3, window_bounds = array<i64: 1, 32>}, {pipeline_mode = #tpu.pipeline_mode<synchronous>, transform_indices = @transform_4, window_bounds = array<i64: 32, 32>}, {pipeline_mode = #tpu.pipeline_mode<synchronous>, transform_indices = @transform_5, window_bounds = array<i64: 1, 32>}, {pipeline_mode = #tpu.pipeline_mode<synchronous>, transform_indices = @transform_6, window_bounds = array<i64: 32, 32>}, {pipeline_mode = #tpu.pipeline_mode<synchronous>, transform_indices = @transform_7, window_bounds = array<i64: 1, 32>}, {pipeline_mode = #tpu.pipeline_mode<synchronous>, transform_indices = @transform_8, window_bounds = array<i64: 32, 32>}, {pipeline_mode = #tpu.pipeline_mode<synchronous>, transform_indices = @transform_9, window_bounds = array<i64: 1, 32>}, {pipeline_mode = #tpu.pipeline_mode<synchronous>, transform_indices = @transform_10, window_bounds = array<i64: 32, 32>}, {pipeline_mode = #tpu.pipeline_mode<synchronous>, transform_indices = @transform_11, window_bounds = array<i64: 1, 32>}, {pipeline_mode = #tpu.pipeline_mode<synchronous>, transform_indices = @transform_12, window_bounds = array<i64: 32, 32>}, {pipeline_mode = #tpu.pipeline_mode<synchronous>, transform_indices = @transform_13, window_bounds = array<i64: 1, 32>}, {pipeline_mode = #tpu.pipeline_mode<synchronous>, transform_indices = @transform_14, window_bounds = array<i64: 32, 32>}, {pipeline_mode = #tpu.pipeline_mode<synchronous>, transform_indices = @transform_15, window_bounds = array<i64: 1, 32>}, {transform_indices = @transform_16, window_bounds = array<i64: 1, 8, 32>}]} {
    %c0 = arith.constant 0 : index
    %c0_0 = arith.constant 0 : index
    %c0_1 = arith.constant 0 : index
    %0 = vector.load %arg2[%c0, %c0_0, %c0_1] : memref<1x16x32xf32, #tpu.memory_space<vmem>>, vector<1x16x32xf32>
    %1 = vector.shape_cast %0 : vector<1x16x32xf32> to vector<16x32xf32>
    %c0_2 = arith.constant 0 : index
    %c0_3 = arith.constant 0 : index
    %c0_4 = arith.constant 0 : index
    %2 = vector.load %arg3[%c0_2, %c0_3, %c0_4] : memref<1x8x32xf32, #tpu.memory_space<vmem>>, vector<1x8x32xf32>
    %3 = vector.shape_cast %2 : vector<1x8x32xf32> to vector<8x32xf32>
    %c0_5 = arith.constant 0 : index
    %c0_6 = arith.constant 0 : index
    %4 = vector.load %arg4[%c0_5, %c0_6] : memref<1x32xf32, #tpu.memory_space<vmem>>, vector<1x32xf32>
    %c0_7 = arith.constant 0 : index
    %c0_8 = arith.constant 0 : index
    %5 = vector.load %arg5[%c0_7, %c0_8] : memref<1x32xf32, #tpu.memory_space<vmem>>, vector<1x32xf32>
    %cst = arith.constant dense<0.000000e+00> : vector<16xf32>
    %6 = vector.multi_reduction <add>, %1, %cst [1] : vector<16x32xf32> to vector<16xf32>
    %7 = vector.shape_cast %6 : vector<16xf32> to vector<16x1xf32>
    %cst_9 = arith.constant 3.125000e-02 : f32
    %8 = vector.broadcast %cst_9 : f32 to vector<16x1xf32>
    %9 = arith.mulf %7, %8 : vector<16x1xf32>
    %10 = vector.broadcast %9 : vector<16x1xf32> to vector<16x32xf32>
    %11 = arith.subf %1, %10 : vector<16x32xf32>
    %12 = arith.mulf %11, %11 : vector<16x32xf32>
    %cst_10 = arith.constant dense<0.000000e+00> : vector<16xf32>
    %13 = vector.multi_reduction <add>, %12, %cst_10 [1] : vector<16x32xf32> to vector<16xf32>
    %14 = vector.shape_cast %13 : vector<16xf32> to vector<16x1xf32>
    %cst_11 = arith.constant 3.125000e-02 : f32
    %15 = vector.broadcast %cst_11 : f32 to vector<16x1xf32>
    %16 = arith.mulf %14, %15 : vector<16x1xf32>
    %cst_12 = arith.constant 9.99999974E-6 : f32
    %17 = vector.broadcast %cst_12 : f32 to vector<16x1xf32>
    %18 = arith.addf %16, %17 : vector<16x1xf32>
    %19 = math.rsqrt %18 : vector<16x1xf32>
    %20 = vector.broadcast %19 : vector<16x1xf32> to vector<16x32xf32>
    %21 = arith.mulf %11, %20 : vector<16x32xf32>
    %22 = vector.broadcast %4 : vector<1x32xf32> to vector<16x32xf32>
    %23 = arith.mulf %21, %22 : vector<16x32xf32>
    %24 = vector.broadcast %5 : vector<1x32xf32> to vector<16x32xf32>
    %25 = arith.addf %23, %24 : vector<16x32xf32>
    %26 = arith.truncf %25 : vector<16x32xf32> to vector<16x32xbf16>
    %c0_13 = arith.constant 0 : index
    %c0_14 = arith.constant 0 : index
    %27 = vector.load %arg8[%c0_13, %c0_14] : memref<32x32xbf16, #tpu.memory_space<vmem>>, vector<32x32xbf16>
    %cst_15 = arith.constant dense<0.000000e+00> : vector<16x32xf32>
    %28 = tpu.matmul %26, %27, %cst_15 {dimension_numbers = #tpu.dot_dimension_numbers<[1], [0], [0], [1], [0, 0, 1, 1], [], []>} : vector<16x32xbf16>, vector<32x32xbf16>, vector<16x32xf32> -> vector<16x32xf32>
    %c0_16 = arith.constant 0 : index
    %c0_17 = arith.constant 0 : index
    %29 = vector.load %arg9[%c0_16, %c0_17] : memref<1x32xf32, #tpu.memory_space<vmem>>, vector<1x32xf32>
    %30 = vector.broadcast %29 : vector<1x32xf32> to vector<16x32xf32>
    %31 = arith.addf %28, %30 : vector<16x32xf32>
    %32 = arith.truncf %31 : vector<16x32xf32> to vector<16x32xbf16>
    %c0_18 = arith.constant 0 : index
    %c0_19 = arith.constant 0 : index
    %33 = vector.load %arg10[%c0_18, %c0_19] : memref<32x32xbf16, #tpu.memory_space<vmem>>, vector<32x32xbf16>
    %cst_20 = arith.constant dense<0.000000e+00> : vector<16x32xf32>
    %34 = tpu.matmul %26, %33, %cst_20 {dimension_numbers = #tpu.dot_dimension_numbers<[1], [0], [0], [1], [0, 0, 1, 1], [], []>} : vector<16x32xbf16>, vector<32x32xbf16>, vector<16x32xf32> -> vector<16x32xf32>
    %c0_21 = arith.constant 0 : index
    %c0_22 = arith.constant 0 : index
    %35 = vector.load %arg11[%c0_21, %c0_22] : memref<1x32xf32, #tpu.memory_space<vmem>>, vector<1x32xf32>
    %36 = vector.broadcast %35 : vector<1x32xf32> to vector<16x32xf32>
    %37 = arith.addf %34, %36 : vector<16x32xf32>
    %38 = arith.truncf %37 : vector<16x32xf32> to vector<16x32xbf16>
    %cst_23 = arith.constant dense<0.000000e+00> : vector<8xf32>
    %39 = vector.multi_reduction <add>, %3, %cst_23 [1] : vector<8x32xf32> to vector<8xf32>
    %40 = vector.shape_cast %39 : vector<8xf32> to vector<8x1xf32>
    %cst_24 = arith.constant 3.125000e-02 : f32
    %41 = vector.broadcast %cst_24 : f32 to vector<8x1xf32>
    %42 = arith.mulf %40, %41 : vector<8x1xf32>
    %43 = vector.broadcast %42 : vector<8x1xf32> to vector<8x32xf32>
    %44 = arith.subf %3, %43 : vector<8x32xf32>
    %45 = arith.mulf %44, %44 : vector<8x32xf32>
    %cst_25 = arith.constant dense<0.000000e+00> : vector<8xf32>
    %46 = vector.multi_reduction <add>, %45, %cst_25 [1] : vector<8x32xf32> to vector<8xf32>
    %47 = vector.shape_cast %46 : vector<8xf32> to vector<8x1xf32>
    %cst_26 = arith.constant 3.125000e-02 : f32
    %48 = vector.broadcast %cst_26 : f32 to vector<8x1xf32>
    %49 = arith.mulf %47, %48 : vector<8x1xf32>
    %cst_27 = arith.constant 9.99999974E-6 : f32
    %50 = vector.broadcast %cst_27 : f32 to vector<8x1xf32>
    %51 = arith.addf %49, %50 : vector<8x1xf32>
    %52 = math.rsqrt %51 : vector<8x1xf32>
    %53 = vector.broadcast %52 : vector<8x1xf32> to vector<8x32xf32>
    %54 = arith.mulf %44, %53 : vector<8x32xf32>
    %55 = vector.broadcast %4 : vector<1x32xf32> to vector<8x32xf32>
    %56 = arith.mulf %54, %55 : vector<8x32xf32>
    %57 = vector.broadcast %5 : vector<1x32xf32> to vector<8x32xf32>
    %58 = arith.addf %56, %57 : vector<8x32xf32>
    %59 = arith.truncf %58 : vector<8x32xf32> to vector<8x32xbf16>
    %c0_28 = arith.constant 0 : index
    %c0_29 = arith.constant 0 : index
    %60 = vector.load %arg6[%c0_28, %c0_29] : memref<32x32xbf16, #tpu.memory_space<vmem>>, vector<32x32xbf16>
    %cst_30 = arith.constant dense<0.000000e+00> : vector<8x32xf32>
    %61 = tpu.matmul %59, %60, %cst_30 {dimension_numbers = #tpu.dot_dimension_numbers<[1], [0], [0], [1], [0, 0, 1, 1], [], []>} : vector<8x32xbf16>, vector<32x32xbf16>, vector<8x32xf32> -> vector<8x32xf32>
    %c0_31 = arith.constant 0 : index
    %c0_32 = arith.constant 0 : index
    %62 = vector.load %arg7[%c0_31, %c0_32] : memref<1x32xf32, #tpu.memory_space<vmem>>, vector<1x32xf32>
    %63 = vector.broadcast %62 : vector<1x32xf32> to vector<8x32xf32>
    %64 = arith.addf %61, %63 : vector<8x32xf32>
    %65 = arith.truncf %64 : vector<8x32xf32> to vector<8x32xbf16>
    %66 = vector.shape_cast %65 : vector<8x32xbf16> to vector<8x4x8xbf16>
    %67 = vector.shape_cast %32 : vector<16x32xbf16> to vector<16x4x8xbf16>
    %68 = vector.shape_cast %38 : vector<16x32xbf16> to vector<16x4x8xbf16>
    "tpu.trace_start"() <{level = 10 : i32, message = "qhd,khd->hqk"}> : () -> ()
    %cst_33 = arith.constant dense<0.000000e+00> : vector<4x8x16xf32>
    %69 = tpu.matmul %66, %67, %cst_33 {dimension_numbers = #tpu.dot_dimension_numbers<[2], [2], [0], [0], [0, 1, 0, 0, 1, 0], [1], [1]>} : vector<8x4x8xbf16>, vector<16x4x8xbf16>, vector<4x8x16xf32> -> vector<4x8x16xf32>
    "tpu.trace_stop"() : () -> ()
    %cst_34 = arith.constant dense<0xFF800000> : vector<4x8xf32>
    %70 = vector.multi_reduction <maximumf>, %69, %cst_34 [2] : vector<4x8x16xf32> to vector<4x8xf32>
    %71 = vector.shape_cast %70 : vector<4x8xf32> to vector<4x8x1xf32>
    %72 = vector.broadcast %71 : vector<4x8x1xf32> to vector<4x8x16xf32>
    %73 = arith.subf %69, %72 : vector<4x8x16xf32>
    %74 = math.exp %73 : vector<4x8x16xf32>
    %cst_35 = arith.constant dense<0.000000e+00> : vector<4x8xf32>
    %75 = vector.multi_reduction <add>, %74, %cst_35 [2] : vector<4x8x16xf32> to vector<4x8xf32>
    %76 = vector.shape_cast %75 : vector<4x8xf32> to vector<4x8x1xf32>
    %77 = tpu.reciprocal %76 {approx = true} : vector<4x8x1xf32> -> vector<4x8x1xf32>
    %78 = vector.broadcast %77 : vector<4x8x1xf32> to vector<4x8x16xf32>
    %79 = arith.mulf %74, %78 : vector<4x8x16xf32>
    %80 = arith.truncf %79 : vector<4x8x16xf32> to vector<4x8x16xbf16>
    "tpu.trace_start"() <{level = 10 : i32, message = "hqk,khd->hqd"}> : () -> ()
    %cst_36 = arith.constant dense<0.000000e+00> : vector<4x8x8xf32>
    %81 = tpu.matmul %80, %68, %cst_36 {dimension_numbers = #tpu.dot_dimension_numbers<[2], [0], [1], [2], [0, 0, 0, 1, 1, 2], [0], [1]>} : vector<4x8x16xbf16>, vector<16x4x8xbf16>, vector<4x8x8xf32> -> vector<4x8x8xf32>
    "tpu.trace_stop"() : () -> ()
    %82 = arith.truncf %81 : vector<4x8x8xf32> to vector<4x8x8xbf16>
    %83 = tpu.transpose %82, [1, 0, 2] : vector<4x8x8xbf16> -> vector<8x4x8xbf16>
    %84 = vector.shape_cast %83 : vector<8x4x8xbf16> to vector<8x32xbf16>
    %c0_37 = arith.constant 0 : index
    %c0_38 = arith.constant 0 : index
    %85 = vector.load %arg12[%c0_37, %c0_38] : memref<32x32xbf16, #tpu.memory_space<vmem>>, vector<32x32xbf16>
    %cst_39 = arith.constant dense<0.000000e+00> : vector<8x32xf32>
    %86 = tpu.matmul %84, %85, %cst_39 {dimension_numbers = #tpu.dot_dimension_numbers<[1], [0], [0], [1], [0, 0, 1, 1], [], []>} : vector<8x32xbf16>, vector<32x32xbf16>, vector<8x32xf32> -> vector<8x32xf32>
    %c0_40 = arith.constant 0 : index
    %c0_41 = arith.constant 0 : index
    %87 = vector.load %arg13[%c0_40, %c0_41] : memref<1x32xf32, #tpu.memory_space<vmem>>, vector<1x32xf32>
    %88 = vector.broadcast %87 : vector<1x32xf32> to vector<8x32xf32>
    %89 = arith.addf %86, %88 : vector<8x32xf32>
    %90 = arith.addf %89, %3 : vector<8x32xf32>
    %cst_42 = arith.constant dense<0.000000e+00> : vector<8xf32>
    %91 = vector.multi_reduction <add>, %90, %cst_42 [1] : vector<8x32xf32> to vector<8xf32>
    %92 = vector.shape_cast %91 : vector<8xf32> to vector<8x1xf32>
    %cst_43 = arith.constant 3.125000e-02 : f32
    %93 = vector.broadcast %cst_43 : f32 to vector<8x1xf32>
    %94 = arith.mulf %92, %93 : vector<8x1xf32>
    %95 = vector.broadcast %94 : vector<8x1xf32> to vector<8x32xf32>
    %96 = arith.subf %90, %95 : vector<8x32xf32>
    %97 = arith.mulf %96, %96 : vector<8x32xf32>
    %cst_44 = arith.constant dense<0.000000e+00> : vector<8xf32>
    %98 = vector.multi_reduction <add>, %97, %cst_44 [1] : vector<8x32xf32> to vector<8xf32>
    %99 = vector.shape_cast %98 : vector<8xf32> to vector<8x1xf32>
    %cst_45 = arith.constant 3.125000e-02 : f32
    %100 = vector.broadcast %cst_45 : f32 to vector<8x1xf32>
    %101 = arith.mulf %99, %100 : vector<8x1xf32>
    %cst_46 = arith.constant 9.99999974E-6 : f32
    %102 = vector.broadcast %cst_46 : f32 to vector<8x1xf32>
    %103 = arith.addf %101, %102 : vector<8x1xf32>
    %104 = math.rsqrt %103 : vector<8x1xf32>
    %105 = vector.broadcast %104 : vector<8x1xf32> to vector<8x32xf32>
    %106 = arith.mulf %96, %105 : vector<8x32xf32>
    %107 = vector.broadcast %4 : vector<1x32xf32> to vector<8x32xf32>
    %108 = arith.mulf %106, %107 : vector<8x32xf32>
    %109 = vector.broadcast %5 : vector<1x32xf32> to vector<8x32xf32>
    %110 = arith.addf %108, %109 : vector<8x32xf32>
    %111 = arith.truncf %110 : vector<8x32xf32> to vector<8x32xbf16>
    %c0_47 = arith.constant 0 : index
    %c0_48 = arith.constant 0 : index
    %112 = vector.load %arg14[%c0_47, %c0_48] : memref<32x32xbf16, #tpu.memory_space<vmem>>, vector<32x32xbf16>
    %cst_49 = arith.constant dense<0.000000e+00> : vector<8x32xf32>
    %113 = tpu.matmul %111, %112, %cst_49 {dimension_numbers = #tpu.dot_dimension_numbers<[1], [0], [0], [1], [0, 0, 1, 1], [], []>} : vector<8x32xbf16>, vector<32x32xbf16>, vector<8x32xf32> -> vector<8x32xf32>
    %c0_50 = arith.constant 0 : index
    %c0_51 = arith.constant 0 : index
    %114 = vector.load %arg15[%c0_50, %c0_51] : memref<1x32xf32, #tpu.memory_space<vmem>>, vector<1x32xf32>
    %115 = vector.broadcast %114 : vector<1x32xf32> to vector<8x32xf32>
    %116 = arith.addf %113, %115 : vector<8x32xf32>
    %cst_52 = arith.constant 5.000000e-01 : f32
    %117 = vector.broadcast %cst_52 : f32 to vector<8x32xf32>
    %118 = arith.mulf %117, %116 : vector<8x32xf32>
    %cst_53 = arith.constant 0.707106769 : f32
    %119 = vector.broadcast %cst_53 : f32 to vector<8x32xf32>
    %120 = arith.mulf %116, %119 : vector<8x32xf32>
    %121 = math.erf %120 : vector<8x32xf32>
    %cst_54 = arith.constant 1.000000e+00 : f32
    %122 = vector.broadcast %cst_54 : f32 to vector<8x32xf32>
    %123 = arith.addf %122, %121 : vector<8x32xf32>
    %124 = arith.mulf %118, %123 : vector<8x32xf32>
    %125 = arith.truncf %124 : vector<8x32xf32> to vector<8x32xbf16>
    %c0_55 = arith.constant 0 : index
    %c0_56 = arith.constant 0 : index
    %126 = vector.load %arg16[%c0_55, %c0_56] : memref<32x32xbf16, #tpu.memory_space<vmem>>, vector<32x32xbf16>
    %cst_57 = arith.constant dense<0.000000e+00> : vector<8x32xf32>
    %127 = tpu.matmul %125, %126, %cst_57 {dimension_numbers = #tpu.dot_dimension_numbers<[1], [0], [0], [1], [0, 0, 1, 1], [], []>} : vector<8x32xbf16>, vector<32x32xbf16>, vector<8x32xf32> -> vector<8x32xf32>
    %c0_58 = arith.constant 0 : index
    %c0_59 = arith.constant 0 : index
    %128 = vector.load %arg17[%c0_58, %c0_59] : memref<1x32xf32, #tpu.memory_space<vmem>>, vector<1x32xf32>
    %129 = vector.broadcast %128 : vector<1x32xf32> to vector<8x32xf32>
    %130 = arith.addf %127, %129 : vector<8x32xf32>
    %131 = arith.addf %130, %90 : vector<8x32xf32>
    %c0_60 = arith.constant 0 : index
    %c0_61 = arith.constant 0 : index
    %c0_62 = arith.constant 0 : index
    %132 = vector.load %arg18[%c0_60, %c0_61, %c0_62] : memref<1x8x32xf32, #tpu.memory_space<vmem>>, vector<1x8x32xf32>
    %133 = vector.shape_cast %132 : vector<1x8x32xf32> to vector<8x32xf32>
    %134 = vector.shape_cast %131 : vector<8x32xf32> to vector<1x8x32xf32>
    tpu.vector_store %arg18[%c0_60, %c0_61, %c0_62], %134 {strides = array<i32>} : memref<1x8x32xf32, #tpu.memory_space<vmem>>, vector<1x8x32xf32>,
    return
  }
  func.func @transform_0(%arg0: i32, %arg1: i32) -> (i32, i32, i32) {
    %c0_i32 = arith.constant 0 : i32
    %c0_i32_0 = arith.constant 0 : i32
    %c0_i32_1 = arith.constant 0 : i32
    return %arg0, %c0_i32, %c0_i32_0 : i32, i32, i32
  }
  func.func @transform_1(%arg0: i32, %arg1: i32) -> (i32, i32, i32) {
    %c0_i32 = arith.constant 0 : i32
    %c0_i32_0 = arith.constant 0 : i32
    return %arg0, %arg1, %c0_i32 : i32, i32, i32
  }
  func.func @transform_2(%arg0: i32, %arg1: i32) -> (i32, i32) {
    %c0_i32 = arith.constant 0 : i32
    %c0_i32_0 = arith.constant 0 : i32
    %c0_i32_1 = arith.constant 0 : i32
    return %c0_i32, %c0_i32_0 : i32, i32
  }
  func.func @transform_3(%arg0: i32, %arg1: i32) -> (i32, i32) {
    %c0_i32 = arith.constant 0 : i32
    %c0_i32_0 = arith.constant 0 : i32
    %c0_i32_1 = arith.constant 0 : i32
    return %c0_i32, %c0_i32_0 : i32, i32
  }
  func.func @transform_4(%arg0: i32, %arg1: i32) -> (i32, i32) {
    %c0_i32 = arith.constant 0 : i32
    %c0_i32_0 = arith.constant 0 : i32
    %c0_i32_1 = arith.constant 0 : i32
    return %c0_i32, %c0_i32_0 : i32, i32
  }
  func.func @transform_5(%arg0: i32, %arg1: i32) -> (i32, i32) {
    %c0_i32 = arith.constant 0 : i32
    %c0_i32_0 = arith.constant 0 : i32
    %c0_i32_1 = arith.constant 0 : i32
    return %c0_i32, %c0_i32_0 : i32, i32
  }
  func.func @transform_6(%arg0: i32, %arg1: i32) -> (i32, i32) {
    %c0_i32 = arith.constant 0 : i32
    %c0_i32_0 = arith.constant 0 : i32
    %c0_i32_1 = arith.constant 0 : i32
    return %c0_i32, %c0_i32_0 : i32, i32
  }
  func.func @transform_7(%arg0: i32, %arg1: i32) -> (i32, i32) {
    %c0_i32 = arith.constant 0 : i32
    %c0_i32_0 = arith.constant 0 : i32
    %c0_i32_1 = arith.constant 0 : i32
    return %c0_i32, %c0_i32_0 : i32, i32
  }
  func.func @transform_8(%arg0: i32, %arg1: i32) -> (i32, i32) {
    %c0_i32 = arith.constant 0 : i32
    %c0_i32_0 = arith.constant 0 : i32
    %c0_i32_1 = arith.constant 0 : i32
    return %c0_i32, %c0_i32_0 : i32, i32
  }
  func.func @transform_9(%arg0: i32, %arg1: i32) -> (i32, i32) {
    %c0_i32 = arith.constant 0 : i32
    %c0_i32_0 = arith.constant 0 : i32
    %c0_i32_1 = arith.constant 0 : i32
    return %c0_i32, %c0_i32_0 : i32, i32
  }
  func.func @transform_10(%arg0: i32, %arg1: i32) -> (i32, i32) {
    %c0_i32 = arith.constant 0 : i32
    %c0_i32_0 = arith.constant 0 : i32
    %c0_i32_1 = arith.constant 0 : i32
    return %c0_i32, %c0_i32_0 : i32, i32
  }
  func.func @transform_11(%arg0: i32, %arg1: i32) -> (i32, i32) {
    %c0_i32 = arith.constant 0 : i32
    %c0_i32_0 = arith.constant 0 : i32
    %c0_i32_1 = arith.constant 0 : i32
    return %c0_i32, %c0_i32_0 : i32, i32
  }
  func.func @transform_12(%arg0: i32, %arg1: i32) -> (i32, i32) {
    %c0_i32 = arith.constant 0 : i32
    %c0_i32_0 = arith.constant 0 : i32
    %c0_i32_1 = arith.constant 0 : i32
    return %c0_i32, %c0_i32_0 : i32, i32
  }
  func.func @transform_13(%arg0: i32, %arg1: i32) -> (i32, i32) {
    %c0_i32 = arith.constant 0 : i32
    %c0_i32_0 = arith.constant 0 : i32
    %c0_i32_1 = arith.constant 0 : i32
    return %c0_i32, %c0_i32_0 : i32, i32
  }
  func.func @transform_14(%arg0: i32, %arg1: i32) -> (i32, i32) {
    %c0_i32 = arith.constant 0 : i32
    %c0_i32_0 = arith.constant 0 : i32
    %c0_i32_1 = arith.constant 0 : i32
    return %c0_i32, %c0_i32_0 : i32, i32
  }
  func.func @transform_15(%arg0: i32, %arg1: i32) -> (i32, i32) {
    %c0_i32 = arith.constant 0 : i32
    %c0_i32_0 = arith.constant 0 : i32
    %c0_i32_1 = arith.constant 0 : i32
    return %c0_i32, %c0_i32_0 : i32, i32
  }
  func.func @transform_16(%arg0: i32, %arg1: i32) -> (i32, i32, i32) {
    %c0_i32 = arith.constant 0 : i32
    %c0_i32_0 = arith.constant 0 : i32
    return %arg0, %arg1, %c0_i32 : i32, i32, i32
  }
}

</mosaic_0001>

<llo_original>
// kernel: encoder_forward.1
$region0: #{encoder_forward.1}
  #allocation0 [shape = 'u32[]', space=smem, size = 0x4, offset = 0x4, fixed_abs, tag = 'smem constant byte address 0x4 - core index']
  #allocation1 [shape = 'u32[144,128]{1,0:T(1,128)}', space=vmem, size = 0x12000, scoped, tag = 'internal scratch']
  %s0 = inlined_call_operand.hbm [shape: f32[2,16,32], index: 0, kind: input, shape index: {}, may-alias: {0,1}]
  %s1 = inlined_call_operand.hbm [shape: f32[2,16,32], index: 1, kind: input, shape index: {}, may-alias: {0,1}]
  %s2 = inlined_call_operand.hbm [shape: f32[1,32], index: 2, kind: input, shape index: {}]
  %s3 = inlined_call_operand.hbm [shape: f32[1,32], index: 3, kind: input, shape index: {}]
  %s4 = inlined_call_operand.hbm [shape: bf16[32,32], index: 4, kind: input, shape index: {}]
  %s5 = inlined_call_operand.hbm [shape: f32[1,32], index: 5, kind: input, shape index: {}]
  %s6 = inlined_call_operand.hbm [shape: bf16[32,32], index: 6, kind: input, shape index: {}]
  %s7 = inlined_call_operand.hbm [shape: f32[1,32], index: 7, kind: input, shape index: {}]
  %s8 = inlined_call_operand.hbm [shape: bf16[32,32], index: 8, kind: input, shape index: {}]
  %s9 = inlined_call_operand.hbm [shape: f32[1,32], index: 9, kind: input, shape index: {}]
  %s10 = inlined_call_operand.vmem [shape: bf16[32,32], index: 10, kind: input, shape index: {}]
  %s11 = inlined_call_operand.vmem [shape: f32[1,32], index: 11, kind: input, shape index: {}]
  %s12 = inlined_call_operand.hbm [shape: bf16[32,32], index: 12, kind: input, shape index: {}]
  %s13 = inlined_call_operand.vmem [shape: f32[1,32], index: 13, kind: input, shape index: {}]
  %s14 = inlined_call_operand.hbm [shape: bf16[32,32], index: 14, kind: input, shape index: {}]
  %s15 = inlined_call_operand.vmem [shape: f32[1,32], index: 15, kind: input, shape index: {}]
  %s16 = inlined_call_operand.hbm [shape: f32[2,16,32], index: 16, kind: output, shape index: {}]
  %s17 = sld [smem:[#allocation0]]
  $region145: #{encoder_forward.1} parent=0
    _
  %s19 = ssub.s32 1, %s17
  %s20 = scalar_select 0, %s19, %s17
  $region1: #{encoder_forward.1} parent=0
    #allocation2 [shape = 'u8[16384]{0}', space=vmem, size = 0x4000, scoped, tag = 'input window, operand 0']
    #allocation3 [shape = 's32[2]{0}', space=sflag, size = 0x8, scoped, tag = 'scoped memory for encoder_forward.1']
    #allocation4 [shape = 's32[2]{0}', space=sflag, size = 0x8, scoped, tag = 'scoped memory for encoder_forward.1']
    #allocation5 [shape = 'u8[8192]{0}', space=vmem, size = 0x2000, scoped, tag = 'input window, operand 1']
    #allocation6 [shape = 's32[2]{0}', space=sflag, size = 0x8, scoped, tag = 'scoped memory for encoder_forward.1']
    #allocation7 [shape = 'u8[512]{0}', space=vmem, size = 0x400, scoped, tag = 'input window, operand 2, single buffered']
    #allocation8 [shape = 'u8[512]{0}', space=vmem, size = 0x400, scoped, tag = 'input window, operand 3, single buffered']
    #allocation9 [shape = 's32[1]{0}', space=sflag, size = 0x4, scoped, tag = 'scoped memory for encoder_forward.1']
    #allocation10 [shape = 'u8[8192]{0}', space=vmem, size = 0x2000, scoped, tag = 'input window, operand 4, single buffered']
    #allocation11 [shape = 'u8[512]{0}', space=vmem, size = 0x400, scoped, tag = 'input window, operand 5, single buffered']
    #allocation12 [shape = 's32[1]{0}', space=sflag, size = 0x4, scoped, tag = 'scoped memory for encoder_forward.1']
    #allocation13 [shape = 'u8[8192]{0}', space=vmem, size = 0x2000, scoped, tag = 'input window, operand 6, single buffered']
    #allocation14 [shape = 'u8[512]{0}', space=vmem, size = 0x400, scoped, tag = 'input window, operand 7, single buffered']
    #allocation15 [shape = 's32[1]{0}', space=sflag, size = 0x4, scoped, tag = 'scoped memory for encoder_forward.1']
    #allocation16 [shape = 'u8[8192]{0}', space=vmem, size = 0x2000, scoped, tag = 'input window, operand 8, single buffered']
    #allocation17 [shape = 'u8[512]{0}', space=vmem, size = 0x400, scoped, tag = 'input window, operand 9, single buffered']
    #allocation18 [shape = 's32[1]{0}', space=sflag, size = 0x4, scoped, tag = 'scoped memory for encoder_forward.1']
    #allocation19 [shape = 'u8[8192]{0}', space=vmem, size = 0x2000, scoped, tag = 'input window, operand 12, single buffered']
    #allocation20 [shape = 'u8[8192]{0}', space=vmem, size = 0x2000, scoped, tag = 'input window, operand 14, single buffered']
    #allocation21 [shape = 's32[1]{0}', space=sflag, size = 0x4, scoped, tag = 'scoped memory for encoder_forward.1']
    #allocation22 [shape = 'u8[8192]{0}', space=vmem, size = 0x2000, scoped, tag = 'output window, operand 0']
    %21 = vsyncpa [#allocation3], 0
    %s22 = scalar_lea.sflag [#allocation3], 1
    %23 = vsyncpa %s22, 0
    %24 = vsyncpa [#allocation6], 0
    %s25 = scalar_lea.sflag [#allocation6], 1
    %26 = vsyncpa %s25, 0
    %27 = vsyncpa [#allocation9], 0
    %28 = vsyncpa [#allocation12], 0
    %29 = vsyncpa [#allocation15], 0
    %30 = vsyncpa [#allocation18], 0
    %31 = vsyncpa [#allocation21], 0
    %32 = vsyncpa [#allocation4], 0
    %s33 = scalar_lea.sflag [#allocation4], 1
    %34 = vsyncpa %s33, 0
    loop: start=0, step=1, limit=6
    $region2: #{encoder_forward.1} parent=1 // loop_pre_header
      _
    $region3: #{encoder_forward.1} parent=1 // loop_header
      %s36 = sphi 0, %s40
      %p37 = scmp.ge.s32.totalorder %s36, 6
      %s43 = sphi 0, %s55
      %s44 = sphi 0, %s51
      %s45 = sphi 0, %s43
      %s46 = sphi 0, %s44
      %s47 = sphi 0, %s45
      %s48 = sphi 0, %s46
      %s58 = sphi 0, %s60
      %s61 = sphi 0, %s58
      %s62 = sphi 0, %s61
      %s78 = sphi 0, %s62
      %s86 = sphi 0, %s88
      %s89 = sphi 0, %s86
      %s90 = sphi 0, %s89
      %s106 = sphi 0, %s90
      %s110 = sphi 0, %s110
      %s112 = sphi 0, %s110
      %s113 = sphi 0, %s112
      %s127 = sphi 0, %s113
      %s131 = sphi 0, %s131
      %s133 = sphi 0, %s131
      %s134 = sphi 0, %s133
      %s148 = sphi 0, %s134
      %s152 = sphi 0, %s152
      %s154 = sphi 0, %s152
      %s155 = sphi 0, %s154
      %s169 = sphi 0, %s155
      %s173 = sphi 0, %s173
      %s175 = sphi 0, %s173
      %s176 = sphi 0, %s175
      %s190 = sphi 0, %s176
      %s194 = sphi 0, %s194
      %s196 = sphi 0, %s194
      %s197 = sphi 0, %s196
      %s211 = sphi 0, %s197
      %s215 = sphi 0, %s215
      %s217 = sphi 0, %s215
      %s218 = sphi 0, %s217
      %s232 = sphi 0, %s218
      %s236 = sphi 0, %s236
      %s238 = sphi 0, %s236
      %s239 = sphi 0, %s238
      %s253 = sphi 0, %s239
      %s257 = sphi 0, %s257
      %s259 = sphi 0, %s257
      %s260 = sphi 0, %s259
      %s274 = sphi 0, %s260
      %s278 = sphi 0, %s278
      %s280 = sphi 0, %s278
      %s281 = sphi 0, %s280
      %s295 = sphi 0, %s281
      %s299 = sphi 0, %s299
      %s301 = sphi 0, %s299
      %s302 = sphi 0, %s301
      %s316 = sphi 0, %s302
      %s320 = sphi 0, %s320
      %s322 = sphi 0, %s320
      %s323 = sphi 0, %s322
      %s337 = sphi 0, %s323
      %s341 = sphi 0, %s341
      %s343 = sphi 0, %s341
      %s344 = sphi 0, %s343
      %s358 = sphi 0, %s344
      %s362 = sphi 0, %s362
      %s364 = sphi 0, %s362
      %s365 = sphi 0, %s364
      %s379 = sphi 0, %s365
      %s383 = sphi 0, %s383
      %s385 = sphi 0, %s383
      %s386 = sphi 0, %s385
      %s400 = sphi 0, %s386
      %s408 = sphi 0, %s410
      %s411 = sphi 0, %s408
      %s412 = sphi 0, %s411
      %s428 = sphi 0, %s412
    $region4: #{encoder_forward.1} parent=1 // loop_header_branch
      %39 = sbr.rel (%p37) target = $region8
    $region5: #{encoder_forward.1} parent=1 // loop_body
      %s41 = ssub.s32 %s36, 1
      %s42 = ssub.s32 %s36, 2
      %s49 = sadd.s32 1, %s44
      %p50 = scmp.ge.s32.totalorder %s49, 2
      %s51 = scalar_select %p50, 0, %s49
      %s52 = sadd.s32 1, %s43
      %s53 = scalar_select %p50, %s52, %s43
      %p54 = scmp.ge.s32.totalorder %s53, 2
      %s55 = scalar_select %p54, 0, %s53
      %s56 = ssub.s32 %s43, %s55
      %p57 = scmp.eq.s32.totalorder %s56, 0
      %s59 = sadd.s32 %s58, 1
      %s60 = scalar_select %p57, %s58, %s59
      %p63 = pneg %p57
      %p64 = scmp.eq.s32.totalorder %s36, 3
      %p65 = por %p63, %p64
      %p66 = scmp.ne.s32.totalorder %s58, %s61
      %p67 = scmp.eq.s32.totalorder %s36, 0
      %p68 = por %p66, %p67
      %p69 = scmp.ne.s32.totalorder %s58, %s61
      %p70 = scmp.eq.s32.totalorder %s41, 3
      %p71 = por %p69, %p70
      %p72 = scmp.ne.s32.totalorder %s61, %s62
      %p73 = scmp.eq.s32.totalorder %s41, 0
      %p74 = por %p72, %p73
      %p75 = scmp.ne.s32.totalorder %s61, %s62
      %p76 = scmp.eq.s32.totalorder %s42, 3
      %p77 = por %p75, %p76
      %p79 = scmp.ne.s32.totalorder %s62, %s78
      %p80 = scmp.eq.s32.totalorder %s42, 0
      %p81 = por %p79, %p80
      %s82 = ssub.s32 %s43, %s55
      %s83 = ssub.s32 %s44, %s51
      %s84 = sor.u32 %s82, %s83
      %p85 = scmp.eq.s32.totalorder %s84, 0
      %s87 = sadd.s32 %s86, 1
      %s88 = scalar_select %p85, %s86, %s87
      %p91 = pneg %p85
      %p92 = scmp.eq.s32.totalorder %s36, 3
      %p93 = por %p91, %p92
      %p94 = scmp.ne.s32.totalorder %s86, %s89
      %p95 = scmp.eq.s32.totalorder %s36, 0
      %p96 = por %p94, %p95
      %p97 = scmp.ne.s32.totalorder %s86, %s89
      %p98 = scmp.eq.s32.totalorder %s41, 3
      %p99 = por %p97, %p98
      %p100 = scmp.ne.s32.totalorder %s89, %s90
      %p101 = scmp.eq.s32.totalorder %s41, 0
      %p102 = por %p100, %p101
      %p103 = scmp.ne.s32.totalorder %s89, %s90
      %p104 = scmp.eq.s32.totalorder %s42, 3
      %p105 = por %p103, %p104
      %p107 = scmp.ne.s32.totalorder %s90, %s106
      %p108 = scmp.eq.s32.totalorder %s42, 0
      %p109 = por %p107, %p108
      %s111 = sadd.s32 %s110, 1
      %p114 = scmp.eq.s32.totalorder %s36, 3
      %p115 = scmp.ne.s32.totalorder %s110, %s112
      %p116 = scmp.eq.s32.totalorder %s36, 0
      %p117 = por %p115, %p116
      %p118 = scmp.ne.s32.totalorder %s110, %s112
      %p119 = scmp.eq.s32.totalorder %s41, 3
      %p120 = por %p118, %p119
      %p121 = scmp.ne.s32.totalorder %s112, %s113
      %p122 = scmp.eq.s32.totalorder %s41, 0
      %p123 = por %p121, %p122
      %p124 = scmp.ne.s32.totalorder %s112, %s113
      %p125 = scmp.eq.s32.totalorder %s42, 3
      %p126 = por %p124, %p125
      %p128 = scmp.ne.s32.totalorder %s113, %s127
      %p129 = scmp.eq.s32.totalorder %s42, 0
      %p130 = por %p128, %p129
      %s132 = sadd.s32 %s131, 1
      %p135 = scmp.eq.s32.totalorder %s36, 3
      %p136 = scmp.ne.s32.totalorder %s131, %s133
      %p137 = scmp.eq.s32.totalorder %s36, 0
      %p138 = por %p136, %p137
      %p139 = scmp.ne.s32.totalorder %s131, %s133
      %p140 = scmp.eq.s32.totalorder %s41, 3
      %p141 = por %p139, %p140
      %p142 = scmp.ne.s32.totalorder %s133, %s134
      %p143 = scmp.eq.s32.totalorder %s41, 0
      %p144 = por %p142, %p143
      %p145 = scmp.ne.s32.totalorder %s133, %s134
      %p146 = scmp.eq.s32.totalorder %s42, 3
      %p147 = por %p145, %p146
      %p149 = scmp.ne.s32.totalorder %s134, %s148
      %p150 = scmp.eq.s32.totalorder %s42, 0
      %p151 = por %p149, %p150
      %s153 = sadd.s32 %s152, 1
      %p156 = scmp.eq.s32.totalorder %s36, 3
      %p157 = scmp.ne.s32.totalorder %s152, %s154
      %p158 = scmp.eq.s32.totalorder %s36, 0
      %p159 = por %p157, %p158
      %p160 = scmp.ne.s32.totalorder %s152, %s154
      %p161 = scmp.eq.s32.totalorder %s41, 3
      %p162 = por %p160, %p161
      %p163 = scmp.ne.s32.totalorder %s154, %s155
      %p164 = scmp.eq.s32.totalorder %s41, 0
      %p165 = por %p163, %p164
      %p166 = scmp.ne.s32.totalorder %s154, %s155
      %p167 = scmp.eq.s32.totalorder %s42, 3
      %p168 = por %p166, %p167
      %p170 = scmp.ne.s32.totalorder %s155, %s169
      %p171 = scmp.eq.s32.totalorder %s42, 0
      %p172 = por %p170, %p171
      %s174 = sadd.s32 %s173, 1
      %p177 = scmp.eq.s32.totalorder %s36, 3
      %p178 = scmp.ne.s32.totalorder %s173, %s175
      %p179 = scmp.eq.s32.totalorder %s36, 0
      %p180 = por %p178, %p179
      %p181 = scmp.ne.s32.totalorder %s173, %s175
      %p182 = scmp.eq.s32.totalorder %s41, 3
      %p183 = por %p181, %p182
      %p184 = scmp.ne.s32.totalorder %s175, %s176
      %p185 = scmp.eq.s32.totalorder %s41, 0
      %p186 = por %p184, %p185
      %p187 = scmp.ne.s32.totalorder %s175, %s176
      %p188 = scmp.eq.s32.totalorder %s42, 3
      %p189 = por %p187, %p188
      %p191 = scmp.ne.s32.totalorder %s176, %s190
      %p192 = scmp.eq.s32.totalorder %s42, 0
      %p193 = por %p191, %p192
      %s195 = sadd.s32 %s194, 1
      %p198 = scmp.eq.s32.totalorder %s36, 3
      %p199 = scmp.ne.s32.totalorder %s194, %s196
      %p200 = scmp.eq.s32.totalorder %s36, 0
      %p201 = por %p199, %p200
      %p202 = scmp.ne.s32.totalorder %s194, %s196
      %p203 = scmp.eq.s32.totalorder %s41, 3
      %p204 = por %p202, %p203
      %p205 = scmp.ne.s32.totalorder %s196, %s197
      %p206 = scmp.eq.s32.totalorder %s41, 0
      %p207 = por %p205, %p206
      %p208 = scmp.ne.s32.totalorder %s196, %s197
      %p209 = scmp.eq.s32.totalorder %s42, 3
      %p210 = por %p208, %p209
      %p212 = scmp.ne.s32.totalorder %s197, %s211
      %p213 = scmp.eq.s32.totalorder %s42, 0
      %p214 = por %p212, %p213
      %s216 = sadd.s32 %s215, 1
      %p219 = scmp.eq.s32.totalorder %s36, 3
      %p220 = scmp.ne.s32.totalorder %s215, %s217
      %p221 = scmp.eq.s32.totalorder %s36, 0
      %p222 = por %p220, %p221
      %p223 = scmp.ne.s32.totalorder %s215, %s217
      %p224 = scmp.eq.s32.totalorder %s41, 3
      %p225 = por %p223, %p224
      %p226 = scmp.ne.s32.totalorder %s217, %s218
      %p227 = scmp.eq.s32.totalorder %s41, 0
      %p228 = por %p226, %p227
      %p229 = scmp.ne.s32.totalorder %s217, %s218
      %p230 = scmp.eq.s32.totalorder %s42, 3
      %p231 = por %p229, %p230
      %p233 = scmp.ne.s32.totalorder %s218, %s232
      %p234 = scmp.eq.s32.totalorder %s42, 0
      %p235 = por %p233, %p234
      %s237 = sadd.s32 %s236, 1
      %p240 = scmp.eq.s32.totalorder %s36, 3
      %p241 = scmp.ne.s32.totalorder %s236, %s238
      %p242 = scmp.eq.s32.totalorder %s36, 0
      %p243 = por %p241, %p242
      %p244 = scmp.ne.s32.totalorder %s236, %s238
      %p245 = scmp.eq.s32.totalorder %s41, 3
      %p246 = por %p244, %p245
      %p247 = scmp.ne.s32.totalorder %s238, %s239
      %p248 = scmp.eq.s32.totalorder %s41, 0
      %p249 = por %p247, %p248
      %p250 = scmp.ne.s32.totalorder %s238, %s239
      %p251 = scmp.eq.s32.totalorder %s42, 3
      %p252 = por %p250, %p251
      %p254 = scmp.ne.s32.totalorder %s239, %s253
      %p255 = scmp.eq.s32.totalorder %s42, 0
      %p256 = por %p254, %p255
      %s258 = sadd.s32 %s257, 1
      %p261 = scmp.eq.s32.totalorder %s36, 3
      %p262 = scmp.ne.s32.totalorder %s257, %s259
      %p263 = scmp.eq.s32.totalorder %s36, 0
      %p264 = por %p262, %p263
      %p265 = scmp.ne.s32.totalorder %s257, %s259
      %p266 = scmp.eq.s32.totalorder %s41, 3
      %p267 = por %p265, %p266
      %p268 = scmp.ne.s32.totalorder %s259, %s260
      %p269 = scmp.eq.s32.totalorder %s41, 0
      %p270 = por %p268, %p269
      %p271 = scmp.ne.s32.totalorder %s259, %s260
      %p272 = scmp.eq.s32.totalorder %s42, 3
      %p273 = por %p271, %p272
      %p275 = scmp.ne.s32.totalorder %s260, %s274
      %p276 = scmp.eq.s32.totalorder %s42, 0
      %p277 = por %p275, %p276
      %s279 = sadd.s32 %s278, 1
      %p282 = scmp.eq.s32.totalorder %s36, 3
      %p283 = scmp.ne.s32.totalorder %s278, %s280
      %p284 = scmp.eq.s32.totalorder %s36, 0
      %p285 = por %p283, %p284
      %p286 = scmp.ne.s32.totalorder %s278, %s280
      %p287 = scmp.eq.s32.totalorder %s41, 3
      %p288 = por %p286, %p287
      %p289 = scmp.ne.s32.totalorder %s280, %s281
      %p290 = scmp.eq.s32.totalorder %s41, 0
      %p291 = por %p289, %p290
      %p292 = scmp.ne.s32.totalorder %s280, %s281
      %p293 = scmp.eq.s32.totalorder %s42, 3
      %p294 = por %p292, %p293
      %p296 = scmp.ne.s32.totalorder %s281, %s295
      %p297 = scmp.eq.s32.totalorder %s42, 0
      %p298 = por %p296, %p297
      %s300 = sadd.s32 %s299, 1
      %p303 = scmp.eq.s32.totalorder %s36, 3
      %p304 = scmp.ne.s32.totalorder %s299, %s301
      %p305 = scmp.eq.s32.totalorder %s36, 0
      %p306 = por %p304, %p305
      %p307 = scmp.ne.s32.totalorder %s299, %s301
      %p308 = scmp.eq.s32.totalorder %s41, 3
      %p309 = por %p307, %p308
      %p310 = scmp.ne.s32.totalorder %s301, %s302
      %p311 = scmp.eq.s32.totalorder %s41, 0
      %p312 = por %p310, %p311
      %p313 = scmp.ne.s32.totalorder %s301, %s302
      %p314 = scmp.eq.s32.totalorder %s42, 3
      %p315 = por %p313, %p314
      %p317 = scmp.ne.s32.totalorder %s302, %s316
      %p318 = scmp.eq.s32.totalorder %s42, 0
      %p319 = por %p317, %p318
      %s321 = sadd.s32 %s320, 1
      %p324 = scmp.eq.s32.totalorder %s36, 3
      %p325 = scmp.ne.s32.totalorder %s320, %s322
      %p326 = scmp.eq.s32.totalorder %s36, 0
      %p327 = por %p325, %p326
      %p328 = scmp.ne.s32.totalorder %s320, %s322
      %p329 = scmp.eq.s32.totalorder %s41, 3
      %p330 = por %p328, %p329
      %p331 = scmp.ne.s32.totalorder %s322, %s323
      %p332 = scmp.eq.s32.totalorder %s41, 0
      %p333 = por %p331, %p332
      %p334 = scmp.ne.s32.totalorder %s322, %s323
      %p335 = scmp.eq.s32.totalorder %s42, 3
      %p336 = por %p334, %p335
      %p338 = scmp.ne.s32.totalorder %s323, %s337
      %p339 = scmp.eq.s32.totalorder %s42, 0
      %p340 = por %p338, %p339
      %s342 = sadd.s32 %s341, 1
      %p345 = scmp.eq.s32.totalorder %s36, 3
      %p346 = scmp.ne.s32.totalorder %s341, %s343
      %p347 = scmp.eq.s32.totalorder %s36, 0
      %p348 = por %p346, %p347
      %p349 = scmp.ne.s32.totalorder %s341, %s343
      %p350 = scmp.eq.s32.totalorder %s41, 3
      %p351 = por %p349, %p350
      %p352 = scmp.ne.s32.totalorder %s343, %s344
      %p353 = scmp.eq.s32.totalorder %s41, 0
      %p354 = por %p352, %p353
      %p355 = scmp.ne.s32.totalorder %s343, %s344
      %p356 = scmp.eq.s32.totalorder %s42, 3
      %p357 = por %p355, %p356
      %p359 = scmp.ne.s32.totalorder %s344, %s358
      %p360 = scmp.eq.s32.totalorder %s42, 0
      %p361 = por %p359, %p360
      %s363 = sadd.s32 %s362, 1
      %p366 = scmp.eq.s32.totalorder %s36, 3
      %p367 = scmp.ne.s32.totalorder %s362, %s364
      %p368 = scmp.eq.s32.totalorder %s36, 0
      %p369 = por %p367, %p368
      %p370 = scmp.ne.s32.totalorder %s362, %s364
      %p371 = scmp.eq.s32.totalorder %s41, 3
      %p372 = por %p370, %p371
      %p373 = scmp.ne.s32.totalorder %s364, %s365
      %p374 = scmp.eq.s32.totalorder %s41, 0
      %p375 = por %p373, %p374
      %p376 = scmp.ne.s32.totalorder %s364, %s365
      %p377 = scmp.eq.s32.totalorder %s42, 3
      %p378 = por %p376, %p377
      %p380 = scmp.ne.s32.totalorder %s365, %s379
      %p381 = scmp.eq.s32.totalorder %s42, 0
      %p382 = por %p380, %p381
      %s384 = sadd.s32 %s383, 1
      %p387 = scmp.eq.s32.totalorder %s36, 3
      %p388 = scmp.ne.s32.totalorder %s383, %s385
      %p389 = scmp.eq.s32.totalorder %s36, 0
      %p390 = por %p388, %p389
      %p391 = scmp.ne.s32.totalorder %s383, %s385
      %p392 = scmp.eq.s32.totalorder %s41, 3
      %p393 = por %p391, %p392
      %p394 = scmp.ne.s32.totalorder %s385, %s386
      %p395 = scmp.eq.s32.totalorder %s41, 0
      %p396 = por %p394, %p395
      %p397 = scmp.ne.s32.totalorder %s385, %s386
      %p398 = scmp.eq.s32.totalorder %s42, 3
      %p399 = por %p397, %p398
      %p401 = scmp.ne.s32.totalorder %s386, %s400
      %p402 = scmp.eq.s32.totalorder %s42, 0
      %p403 = por %p401, %p402
      %s404 = ssub.s32 %s43, %s55
      %s405 = ssub.s32 %s44, %s51
      %s406 = sor.u32 %s404, %s405
      %p407 = scmp.eq.s32.totalorder %s406, 0
      %s409 = sadd.s32 %s408, 1
      %s410 = scalar_select %p407, %s408, %s409
      %p413 = pneg %p407
      %p414 = scmp.eq.s32.totalorder %s36, 3
      %p415 = por %p413, %p414
      %p416 = scmp.ne.s32.totalorder %s408, %s411
      %p417 = scmp.eq.s32.totalorder %s36, 0
      %p418 = por %p416, %p417
      %p419 = scmp.ne.s32.totalorder %s408, %s411
      %p420 = scmp.eq.s32.totalorder %s41, 3
      %p421 = por %p419, %p420
      %p422 = scmp.ne.s32.totalorder %s411, %s412
      %p423 = scmp.eq.s32.totalorder %s41, 0
      %p424 = por %p422, %p423
      %p425 = scmp.ne.s32.totalorder %s411, %s412
      %p426 = scmp.eq.s32.totalorder %s42, 3
      %p427 = por %p425, %p426
      %p429 = scmp.ne.s32.totalorder %s412, %s428
      %p430 = scmp.eq.s32.totalorder %s42, 0
      %p431 = por %p429, %p430
      %p432 = scmp.le.s32.totalorder 1, %s36
      %p433 = scmp.lt.s32.totalorder %s36, 5
      %p434 = pnand %p432, %p433
      %p435 = pneg %p434
      // Predicated region
      $region9: #{encoder_forward.1} parent=5 // pred_check
        _
      $region10: #{encoder_forward.1} parent=5 // pred_check_branch
        %437 = sbr.rel (%p434) target = $region12
      $region11: #{encoder_forward.1} parent=5 // pred_region
        %s438 = ssub.s32 %s36, 1
        // Predicated region
        $region13: #{encoder_forward.1} parent=11 // pred_check
          %p439 = pneg %p123
        $region14: #{encoder_forward.1} parent=11 // pred_check_branch
          %441 = sbr.rel (%p439) target = $region16
        $region15: #{encoder_forward.1} parent=11 // pred_region
          %s443 = ssub.s32 16, 16
          %444 = vsyncadd [#allocation6], %s443
          %s446 = sshll.u32 [#allocation7], 4
          %s447 = int_to_ptr.vmem [resolvable:$true] %s446
          %449 = dma.hbm_to_vmem [thread:$0]  %s2, 16, %s447, [#allocation6]
        $region16: #{encoder_forward.1} parent=11 // pred_fallthru
          _
        // Predicated region
        $region17: #{encoder_forward.1} parent=11 // pred_check
          %p450 = pneg %p144
        $region18: #{encoder_forward.1} parent=11 // pred_check_branch
          %452 = sbr.rel (%p450) target = $region20
        $region19: #{encoder_forward.1} parent=11 // pred_region
          %s454 = ssub.s32 16, 16
          %455 = vsyncadd [#allocation9], %s454
          %s457 = sshll.u32 [#allocation8], 4
          %s458 = int_to_ptr.vmem [resolvable:$true] %s457
          %460 = dma.hbm_to_vmem [thread:$0]  %s3, 16, %s458, [#allocation9]
        $region20: #{encoder_forward.1} parent=11 // pred_fallthru
          _
        // Predicated region
        $region21: #{encoder_forward.1} parent=11 // pred_check
          %p461 = pneg %p165
        $region22: #{encoder_forward.1} parent=11 // pred_check_branch
          %463 = sbr.rel (%p461) target = $region24
        $region23: #{encoder_forward.1} parent=11 // pred_region
          %s465 = ssub.s32 256, 256
          %466 = vsyncadd [#allocation9], %s465
          %s467 = sshll.u32 [#allocation10], 4
          %s468 = int_to_ptr.vmem [resolvable:$true] %s467
          %473 = dma.hbm_to_vmem [thread:$0]  %s4, 256, %s468, [#allocation9], 64, 64, 4
        $region24: #{encoder_forward.1} parent=11 // pred_fallthru
          _
        // Predicated region
        $region25: #{encoder_forward.1} parent=11 // pred_check
          %p474 = pneg %p186
        $region26: #{encoder_forward.1} parent=11 // pred_check_branch
          %476 = sbr.rel (%p474) target = $region28
        $region27: #{encoder_forward.1} parent=11 // pred_region
          %s478 = ssub.s32 16, 16
          %479 = vsyncadd [#allocation12], %s478
          %s481 = sshll.u32 [#allocation11], 4
          %s482 = int_to_ptr.vmem [resolvable:$true] %s481
          %484 = dma.hbm_to_vmem [thread:$0]  %s5, 16, %s482, [#allocation12]
        $region28: #{encoder_forward.1} parent=11 // pred_fallthru
          _
        // Predicated region
        $region29: #{encoder_forward.1} parent=11 // pred_check
          %p485 = pneg %p207
        $region30: #{encoder_forward.1} parent=11 // pred_check_branch
          %487 = sbr.rel (%p485) target = $region32
        $region31: #{encoder_forward.1} parent=11 // pred_region
          %s489 = ssub.s32 256, 256
          %490 = vsyncadd [#allocation12], %s489
          %s491 = sshll.u32 [#allocation13], 4
          %s492 = int_to_ptr.vmem [resolvable:$true] %s491
          %497 = dma.hbm_to_vmem [thread:$0]  %s6, 256, %s492, [#allocation12], 64, 64, 4
        $region32: #{encoder_forward.1} parent=11 // pred_fallthru
          _
        // Predicated region
        $region33: #{encoder_forward.1} parent=11 // pred_check
          %p498 = pneg %p228
        $region34: #{encoder_forward.1} parent=11 // pred_check_branch
          %500 = sbr.rel (%p498) target = $region36
        $region35: #{encoder_forward.1} parent=11 // pred_region
          %s502 = ssub.s32 16, 16
          %503 = vsyncadd [#allocation15], %s502
          %s505 = sshll.u32 [#allocation14], 4
          %s506 = int_to_ptr.vmem [resolvable:$true] %s505
          %508 = dma.hbm_to_vmem [thread:$0]  %s7, 16, %s506, [#allocation15]
        $region36: #{encoder_forward.1} parent=11 // pred_fallthru
          _
        // Predicated region
        $region37: #{encoder_forward.1} parent=11 // pred_check
          %p509 = pneg %p249
        $region38: #{encoder_forward.1} parent=11 // pred_check_branch
          %511 = sbr.rel (%p509) target = $region40
        $region39: #{encoder_forward.1} parent=11 // pred_region
          %s513 = ssub.s32 256, 256
          %514 = vsyncadd [#allocation15], %s513
          %s515 = sshll.u32 [#allocation16], 4
          %s516 = int_to_ptr.vmem [resolvable:$true] %s515
          %521 = dma.hbm_to_vmem [thread:$0]  %s8, 256, %s516, [#allocation15], 64, 64, 4
        $region40: #{encoder_forward.1} parent=11 // pred_fallthru
          _
        // Predicated region
        $region41: #{encoder_forward.1} parent=11 // pred_check
          %p522 = pneg %p270
        $region42: #{encoder_forward.1} parent=11 // pred_check_branch
          %524 = sbr.rel (%p522) target = $region44
        $region43: #{encoder_forward.1} parent=11 // pred_region
          %s526 = ssub.s32 16, 16
          %527 = vsyncadd [#allocation18], %s526
          %s529 = sshll.u32 [#allocation17], 4
          %s530 = int_to_ptr.vmem [resolvable:$true] %s529
          %532 = dma.hbm_to_vmem [thread:$0]  %s9, 16, %s530, [#allocation18]
        $region44: #{encoder_forward.1} parent=11 // pred_fallthru
          _
        // Predicated region
        $region45: #{encoder_forward.1} parent=11 // pred_check
          %p533 = pneg %p291
        $region46: #{encoder_forward.1} parent=11 // pred_check_branch
          %535 = sbr.rel (%p533) target = $region48
        $region47: #{encoder_forward.1} parent=11 // pred_region
          _
        $region48: #{encoder_forward.1} parent=11 // pred_fallthru
          _
        // Predicated region
        $region49: #{encoder_forward.1} parent=11 // pred_check
          %p536 = pneg %p312
        $region50: #{encoder_forward.1} parent=11 // pred_check_branch
          %538 = sbr.rel (%p536) target = $region52
        $region51: #{encoder_forward.1} parent=11 // pred_region
          _
        $region52: #{encoder_forward.1} parent=11 // pred_fallthru
          _
        // Predicated region
        $region53: #{encoder_forward.1} parent=11 // pred_check
          %p539 = pneg %p333
        $region54: #{encoder_forward.1} parent=11 // pred_check_branch
          %541 = sbr.rel (%p539) target = $region56
        $region55: #{encoder_forward.1} parent=11 // pred_region
          %s543 = ssub.s32 256, 256
          %544 = vsyncadd [#allocation18], %s543
          %s545 = sshll.u32 [#allocation19], 4
          %s546 = int_to_ptr.vmem [resolvable:$true] %s545
          %551 = dma.hbm_to_vmem [thread:$0]  %s12, 256, %s546, [#allocation18], 64, 64, 4
        $region56: #{encoder_forward.1} parent=11 // pred_fallthru
          _
        // Predicated region
        $region57: #{encoder_forward.1} parent=11 // pred_check
          %p552 = pneg %p354
        $region58: #{encoder_forward.1} parent=11 // pred_check_branch
          %554 = sbr.rel (%p552) target = $region60
        $region59: #{encoder_forward.1} parent=11 // pred_region
          _
        $region60: #{encoder_forward.1} parent=11 // pred_fallthru
          _
        // Predicated region
        $region61: #{encoder_forward.1} parent=11 // pred_check
          %p555 = pneg %p375
        $region62: #{encoder_forward.1} parent=11 // pred_check_branch
          %557 = sbr.rel (%p555) target = $region64
        $region63: #{encoder_forward.1} parent=11 // pred_region
          %s559 = ssub.s32 256, 256
          %560 = vsyncadd [#allocation21], %s559
          %s561 = sshll.u32 [#allocation20], 4
          %s562 = int_to_ptr.vmem [resolvable:$true] %s561
          %567 = dma.hbm_to_vmem [thread:$0]  %s14, 256, %s562, [#allocation21], 64, 64, 4
        $region64: #{encoder_forward.1} parent=11 // pred_fallthru
          _
        // Predicated region
        $region65: #{encoder_forward.1} parent=11 // pred_check
          %p568 = pneg %p396
        $region66: #{encoder_forward.1} parent=11 // pred_check_branch
          %570 = sbr.rel (%p568) target = $region68
        $region67: #{encoder_forward.1} parent=11 // pred_region
          _
        $region68: #{encoder_forward.1} parent=11 // pred_fallthru
          _
      $region12: #{encoder_forward.1} parent=5 // pred_fallthru
        _
      %p571 = scmp.lt.s32.totalorder %s36, 4
      // Predicated region
      $region69: #{encoder_forward.1} parent=5 // pred_check
        %p572 = pneg %p571
      $region70: #{encoder_forward.1} parent=5 // pred_check_branch
        %574 = sbr.rel (%p572) target = $region72
      $region71: #{encoder_forward.1} parent=5 // pred_region
        // Predicated region
        $region73: #{encoder_forward.1} parent=71 // pred_check
          %p575 = pneg %p68
        $region74: #{encoder_forward.1} parent=71 // pred_check_branch
          %577 = sbr.rel (%p575) target = $region76
        $region75: #{encoder_forward.1} parent=71 // pred_region
          %s578 = sand.u32 %s58, 1
          %s579 = scalar_lea.sflag [#allocation3], %s578
          %s580 = sand.u32 %s58, 1
          %s581 = smul.addr %s580, 16
          %s582 = scalar_lea.vmem [#allocation2], %s581
          %s584 = ssub.s32 256, 256
          %585 = vsyncadd %s579, %s584
          %s586 = smul.addr %s43, 2
          %s587 = smul.addr %s586, 128
          %s588 = scalar_lea.hbm %s0, %s587
          %s589 = sshll.u32 %s582, 4
          %s590 = int_to_ptr.vmem [resolvable:$true] %s589
          %595 = dma.hbm_to_vmem [thread:$0]  %s588, 256, %s590, %s579, 128, 128, 8
        $region76: #{encoder_forward.1} parent=71 // pred_fallthru
          _
        // Predicated region
        $region77: #{encoder_forward.1} parent=71 // pred_check
          %p596 = pneg %p96
        $region78: #{encoder_forward.1} parent=71 // pred_check_branch
          %598 = sbr.rel (%p596) target = $region80
        $region79: #{encoder_forward.1} parent=71 // pred_region
          %s599 = sand.u32 %s36, 1
          %s600 = scalar_lea.sflag [#allocation6], %s599
          %s601 = sand.u32 %s86, 1
          %s602 = smul.addr %s601, 8
          %s603 = scalar_lea.vmem [#allocation5], %s602
          %s605 = ssub.s32 128, 128
          %606 = vsyncadd %s600, %s605
          %s607 = smul.addr %s43, 2
          %s608 = sadd.s32 %s44, %s607
          %s609 = smul.addr %s608, 128
          %s610 = scalar_lea.hbm %s1, %s609
          %s612 = sshll.u32 %s603, 4
          %s613 = int_to_ptr.vmem [resolvable:$true] %s612
          %615 = dma.hbm_to_vmem [thread:$0]  %s610, 128, %s613, %s600
        $region80: #{encoder_forward.1} parent=71 // pred_fallthru
          _
      $region72: #{encoder_forward.1} parent=5 // pred_fallthru
        _
      %p616 = scmp.le.s32.totalorder 1, %s36
      %p617 = scmp.lt.s32.totalorder %s36, 5
      %p618 = pnand %p616, %p617
      %p619 = pneg %p618
      // Predicated region
      $region81: #{encoder_forward.1} parent=5 // pred_check
        _
      $region82: #{encoder_forward.1} parent=5 // pred_check_branch
        %621 = sbr.rel (%p618) target = $region84
      $region83: #{encoder_forward.1} parent=5 // pred_region
        %s622 = ssub.s32 %s36, 1
        %s623 = sand.u32 %s61, 1
        %s624 = scalar_lea.sflag [#allocation3], %s623
        %s625 = sand.u32 %s61, 1
        %s626 = smul.addr %s625, 16
        %s627 = scalar_lea.vmem [#allocation2], %s626
        // Predicated region
        $region85: #{encoder_forward.1} parent=83 // pred_check
          %p628 = pneg %p74
        $region86: #{encoder_forward.1} parent=83 // pred_check_branch
          %630 = sbr.rel (%p628) target = $region88
        $region87: #{encoder_forward.1} parent=83 // pred_region
          %631 = dma.done %s624, 256
        $region88: #{encoder_forward.1} parent=83 // pred_fallthru
          _
        %s632 = sand.u32 %s41, 1
        %s633 = scalar_lea.sflag [#allocation6], %s632
        %s634 = sand.u32 %s89, 1
        %s635 = smul.addr %s634, 8
        %s636 = scalar_lea.vmem [#allocation5], %s635
        // Predicated region
        $region89: #{encoder_forward.1} parent=83 // pred_check
          %p637 = pneg %p102
        $region90: #{encoder_forward.1} parent=83 // pred_check_branch
          %639 = sbr.rel (%p637) target = $region92
        $region91: #{encoder_forward.1} parent=83 // pred_region
          %640 = dma.done %s633, 128
        $region92: #{encoder_forward.1} parent=83 // pred_fallthru
          _
        // Predicated region
        $region93: #{encoder_forward.1} parent=83 // pred_check
          %p641 = pneg %p123
        $region94: #{encoder_forward.1} parent=83 // pred_check_branch
          %643 = sbr.rel (%p641) target = $region96
        $region95: #{encoder_forward.1} parent=83 // pred_region
          %644 = dma.done [#allocation6], 16
        $region96: #{encoder_forward.1} parent=83 // pred_fallthru
          _
        // Predicated region
        $region97: #{encoder_forward.1} parent=83 // pred_check
          %p645 = pneg %p144
        $region98: #{encoder_forward.1} parent=83 // pred_check_branch
          %647 = sbr.rel (%p645) target = $region100
        $region99: #{encoder_forward.1} parent=83 // pred_region
          %648 = dma.done [#allocation9], 16
        $region100: #{encoder_forward.1} parent=83 // pred_fallthru
          _
        // Predicated region
        $region101: #{encoder_forward.1} parent=83 // pred_check
          %p649 = pneg %p165
        $region102: #{encoder_forward.1} parent=83 // pred_check_branch
          %651 = sbr.rel (%p649) target = $region104
        $region103: #{encoder_forward.1} parent=83 // pred_region
          %652 = dma.done [#allocation9], 256
        $region104: #{encoder_forward.1} parent=83 // pred_fallthru
          _
        // Predicated region
        $region105: #{encoder_forward.1} parent=83 // pred_check
          %p653 = pneg %p186
        $region106: #{encoder_forward.1} parent=83 // pred_check_branch
          %655 = sbr.rel (%p653) target = $region108
        $region107: #{encoder_forward.1} parent=83 // pred_region
          %656 = dma.done [#allocation12], 16
        $region108: #{encoder_forward.1} parent=83 // pred_fallthru
          _
        // Predicated region
        $region109: #{encoder_forward.1} parent=83 // pred_check
          %p657 = pneg %p207
        $region110: #{encoder_forward.1} parent=83 // pred_check_branch
          %659 = sbr.rel (%p657) target = $region112
        $region111: #{encoder_forward.1} parent=83 // pred_region
          %660 = dma.done [#allocation12], 256
        $region112: #{encoder_forward.1} parent=83 // pred_fallthru
          _
        // Predicated region
        $region113: #{encoder_forward.1} parent=83 // pred_check
          %p661 = pneg %p228
        $region114: #{encoder_forward.1} parent=83 // pred_check_branch
          %663 = sbr.rel (%p661) target = $region116
        $region115: #{encoder_forward.1} parent=83 // pred_region
          %664 = dma.done [#allocation15], 16
        $region116: #{encoder_forward.1} parent=83 // pred_fallthru
          _
        // Predicated region
        $region117: #{encoder_forward.1} parent=83 // pred_check
          %p665 = pneg %p249
        $region118: #{encoder_forward.1} parent=83 // pred_check_branch
          %667 = sbr.rel (%p665) target = $region120
        $region119: #{encoder_forward.1} parent=83 // pred_region
          %668 = dma.done [#allocation15], 256
        $region120: #{encoder_forward.1} parent=83 // pred_fallthru
          _
        // Predicated region
        $region121: #{encoder_forward.1} parent=83 // pred_check
          %p669 = pneg %p270
        $region122: #{encoder_forward.1} parent=83 // pred_check_branch
          %671 = sbr.rel (%p669) target = $region124
        $region123: #{encoder_forward.1} parent=83 // pred_region
          %672 = dma.done [#allocation18], 16
        $region124: #{encoder_forward.1} parent=83 // pred_fallthru
          _
        // Predicated region
        $region125: #{encoder_forward.1} parent=83 // pred_check
          %p673 = pneg %p333
        $region126: #{encoder_forward.1} parent=83 // pred_check_branch
          %675 = sbr.rel (%p673) target = $region128
        $region127: #{encoder_forward.1} parent=83 // pred_region
          %676 = dma.done [#allocation18], 256
        $region128: #{encoder_forward.1} parent=83 // pred_fallthru
          _
        // Predicated region
        $region129: #{encoder_forward.1} parent=83 // pred_check
          %p677 = pneg %p375
        $region130: #{encoder_forward.1} parent=83 // pred_check_branch
          %679 = sbr.rel (%p677) target = $region132
        $region131: #{encoder_forward.1} parent=83 // pred_region
          %680 = dma.done [#allocation21], 256
        $region132: #{encoder_forward.1} parent=83 // pred_fallthru
          _
        %s681 = sand.u32 %s61, 1
        %s682 = scalar_lea.sflag [#allocation3], %s681
        %s683 = sand.u32 %s61, 1
        %s684 = smul.addr %s683, 16
        %s685 = scalar_lea.vmem [#allocation2], %s684
        %p686 = pneg %p74
        %p687 = pneg %p71
        %s688 = sand.u32 %s41, 1
        %s689 = scalar_lea.sflag [#allocation6], %s688
        %s690 = sand.u32 %s89, 1
        %s691 = smul.addr %s690, 8
        %s692 = scalar_lea.vmem [#allocation5], %s691
        %p693 = pneg %p102
        %p694 = pneg %p99
        %p695 = pneg %p123
        %p696 = pneg %p120
        %p697 = pneg %p144
        %p698 = pneg %p141
        %p699 = pneg %p165
        %p700 = pneg %p162
        %p701 = pneg %p186
        %p702 = pneg %p183
        %p703 = pneg %p207
        %p704 = pneg %p204
        %p705 = pneg %p228
        %p706 = pneg %p225
        %p707 = pneg %p249
        %p708 = pneg %p246
        %p709 = pneg %p270
        %p710 = pneg %p267
        %p711 = pneg %p291
        %p712 = pneg %p288
        %p713 = pneg %p312
        %p714 = pneg %p309
        %p715 = pneg %p333
        %p716 = pneg %p330
        %p717 = pneg %p354
        %p718 = pneg %p351
        %p719 = pneg %p375
        %p720 = pneg %p372
        %p721 = pneg %p396
        %p722 = pneg %p393
        %p723 = pneg %p424
        %p724 = pneg %p421
        %s725 = sand.u32 %s411, 1
        %s726 = scalar_lea.sflag [#allocation4], %s725
        %s727 = sand.u32 %s411, 1
        %s728 = smul.addr %s727, 8
        %s729 = scalar_lea.vmem [#allocation22], %s728
        %v731 = vld [vmem:[%s627] sm:$0xff]
        %v732 = vld [vmem:[%s627 + $0x8] sm:$0xff]
        %v733 = vld [vmem:[%s636] sm:$0xff]
        %v734 = vld [vmem:[#allocation7] sm:$0x1]
        %v735 = vld [vmem:[#allocation8] sm:$0x1]
        %vm736 = vcmask 261120
        %v737 = vsel %vm736, %v731, 0.0
        %738 = vadd.xlane.f32.xlu0 %v737
        %v739 = vpop.xlane.xlu0 %738
        %v740 = vsel %vm736, %v732, 0.0
        %741 = vadd.xlane.f32.xlu0 %v740
        %v742 = vpop.xlane.xlu0 %741
        %v743 = vmul.f32 %v739, 0.03125
        %v744 = vmul.f32 %v742, 0.03125
        %v745 = vsub.f32 %v731, %v743
        %v746 = vsub.f32 %v732, %v744
        %v747 = vmul.f32 %v745, %v745
        %v748 = vmul.f32 %v746, %v746
        %v749 = vsel %vm736, %v747, 0.0
        %750 = vadd.xlane.f32.xlu0 %v749
        %v751 = vpop.xlane.xlu0 %750
        %v752 = vsel %vm736, %v748, 0.0
        %753 = vadd.xlane.f32.xlu0 %v752
        %v754 = vpop.xlane.xlu0 %753
        %v755 = vmul.f32 %v751, 0.03125
        %v756 = vmul.f32 %v754, 0.03125
        %v757 = vadd.f32 %v755, 1e-05
        %v758 = vadd.f32 %v756, 1e-05
        %v759 = vrsqrt.pop %v757
        %v760 = vrsqrt.pop %v758
        %v761 = vmul.f32 %v745, %v759
        %v762 = vmul.f32 %v746, %v760
        %v764 = vlaneseq
        %v765 = vshrl.u32 %v764, 7
        %v766 = vsub.s32 0, %v765
        %v767 = vrot.slane %v734, %v766
        %v769 = vmul.f32 %v761, %v767
        %v770 = vmul.f32 %v762, %v767
        %v772 = vlaneseq
        %v773 = vshrl.u32 %v772, 7
        %v774 = vsub.s32 0, %v773
        %v775 = vrot.slane %v735, %v774
        %v777 = vadd.f32 %v769, %v775
        %v778 = vadd.f32 %v770, %v775
        %v779 = vpack.c.bf16 %v778, %v777
        %v780 = vld [vmem:[#allocation13] sm:$0xf]
        %v781 = vld [vmem:[#allocation13 + $0x4] sm:$0xf]
        %v782 = vld [vmem:[#allocation13 + $0x8] sm:$0xf]
        %v783 = vld [vmem:[#allocation13 + $0xc] sm:$0xf]
        %v784 = vld [vmem:[#allocation14] sm:$0x1]
        %v786 = vlaneseq
        %v787 = vshrl.u32 %v786, 7
        %v788 = vsub.s32 0, %v787
        %v789 = vrot.slane %v784, %v788
        %v795 = vunpack.c.l.b16 %v780
        %v796 = vunpack.c.l.b16 %v781
        %v797 = vunpack.c.l.b16 %v782
        %v798 = vunpack.c.l.b16 %v783
        %v799 = vpack.c.b16 %v796, %v795
        %v800 = vpack.c.b16 %v798, %v797
        %v804 = vsel %vm736, %v779, 0
        %806 = vmatprep.subr.bf16.mxu0 0
        %807 = vmatpush1.bf16.msra.mxu0 0
        %808 = vmatprep.subr.bf16.mxu0 0
        %809 = vmatpush1.bf16.msra.mxu0 0
        %810 = vmatprep.subr.bf16.mxu0 0
        %811 = vmatpush1.bf16.msra.mxu0 0
        %812 = vmatprep.subr.bf16.mxu0 0
        %813 = vmatpush1.bf16.msra.mxu0 0
        %814 = vmatprep.subr.bf16.mxu0 0
        %815 = vmatpush1.bf16.msra.mxu0 0
        %816 = vmatprep.subr.bf16.mxu0 0
        %817 = vmatpush1.bf16.msra.mxu0 0
        %818 = vmatprep.subr.bf16.mxu0 0
        %819 = vmatpush1.bf16.msra.mxu0 %v800
        %820 = vmatprep.subr.bf16.mxu0 0
        %821 = vmatpush1.bf16.msra.mxu0 %v799
        %822 = vmatprep.subr.bf16.mxu0 0
        %823 = vmatpush2.bf16.msra.mxu0 0
        %824 = vmatprep.subr.bf16.mxu0 0
        %825 = vmatpush2.bf16.msra.mxu0 0
        %826 = vmatprep.subr.bf16.mxu0 0
        %827 = vmatpush2.bf16.msra.mxu0 0
        %828 = vmatprep.subr.bf16.mxu0 0
        %829 = vmatpush2.bf16.msra.mxu0 0
        %830 = vmatprep.subr.bf16.mxu0 0
        %831 = vmatpush2.bf16.msra.mxu0 0
        %832 = vmatprep.subr.bf16.mxu0 0
        %833 = vmatpush2.bf16.msra.mxu0 0
        %834 = vmatprep.subr.bf16.mxu0 0
        %835 = vmatpush2.bf16.msra.mxu0 0
        %836 = vmatprep.subr.bf16.mxu0 0
        %837 = vmatpush2.bf16.msra.mxu0 0
        %838 = vmatprep.mubr.bf16.mxu0 0
        %839 = vmatmul.mubr.bf16.gmra.mxu0 %v804
        %v840 = vpop.f32.mrf.mxu0
        %v841 = vadd.f32 %v789, %v840
        %v842 = vpop.f32.mrf.mxu0
        %v843 = vpop.f32.mrf.mxu0
        %v844 = vadd.f32 %v789, %v843
        %v845 = vpop.f32.mrf.mxu0
        %846 = vdwg.mxu0
        %v847 = vpack.c.bf16 %v844, %v841
        %v848 = vld [vmem:[#allocation16] sm:$0xf]
        %v849 = vld [vmem:[#allocation16 + $0x4] sm:$0xf]
        %v850 = vld [vmem:[#allocation16 + $0x8] sm:$0xf]
        %v851 = vld [vmem:[#allocation16 + $0xc] sm:$0xf]
        %v852 = vld [vmem:[#allocation17] sm:$0x1]
        %v854 = vlaneseq
        %v855 = vshrl.u32 %v854, 7
        %v856 = vsub.s32 0, %v855
        %v857 = vrot.slane %v852, %v856
        %v863 = vunpack.c.l.b16 %v848
        %v864 = vunpack.c.l.b16 %v849
        %v865 = vunpack.c.l.b16 %v850
        %v866 = vunpack.c.l.b16 %v851
        %v867 = vpack.c.b16 %v864, %v863
        %v868 = vpack.c.b16 %v866, %v865
        %871 = vmatprep.subr.bf16.mxu0 0
        %872 = vmatpush1.bf16.msra.mxu0 0
        %873 = vmatprep.subr.bf16.mxu0 0
        %874 = vmatpush1.bf16.msra.mxu0 0
        %875 = vmatprep.subr.bf16.mxu0 0
        %876 = vmatpush1.bf16.msra.mxu0 0
        %877 = vmatprep.subr.bf16.mxu0 0
        %878 = vmatpush1.bf16.msra.mxu0 0
        %879 = vmatprep.subr.bf16.mxu0 0
        %880 = vmatpush1.bf16.msra.mxu0 0
        %881 = vmatprep.subr.bf16.mxu0 0
        %882 = vmatpush1.bf16.msra.mxu0 0
        %883 = vmatprep.subr.bf16.mxu0 0
        %884 = vmatpush1.bf16.msra.mxu0 %v868
        %885 = vmatprep.subr.bf16.mxu0 0
        %886 = vmatpush1.bf16.msra.mxu0 %v867
        %887 = vmatprep.subr.bf16.mxu0 0
        %888 = vmatpush2.bf16.msra.mxu0 0
        %889 = vmatprep.subr.bf16.mxu0 0
        %890 = vmatpush2.bf16.msra.mxu0 0
        %891 = vmatprep.subr.bf16.mxu0 0
        %892 = vmatpush2.bf16.msra.mxu0 0
        %893 = vmatprep.subr.bf16.mxu0 0
        %894 = vmatpush2.bf16.msra.mxu0 0
        %895 = vmatprep.subr.bf16.mxu0 0
        %896 = vmatpush2.bf16.msra.mxu0 0
        %897 = vmatprep.subr.bf16.mxu0 0
        %898 = vmatpush2.bf16.msra.mxu0 0
        %899 = vmatprep.subr.bf16.mxu0 0
        %900 = vmatpush2.bf16.msra.mxu0 0
        %901 = vmatprep.subr.bf16.mxu0 0
        %902 = vmatpush2.bf16.msra.mxu0 0
        %903 = vmatprep.mubr.bf16.mxu0 0
        %904 = vmatmul.mubr.bf16.gmra.mxu0 %v804
        %v905 = vpop.f32.mrf.mxu0
        %v906 = vadd.f32 %v857, %v905
        %v907 = vpop.f32.mrf.mxu0
        %v908 = vpop.f32.mrf.mxu0
        %v909 = vadd.f32 %v857, %v908
        %v910 = vpop.f32.mrf.mxu0
        %911 = vdwg.mxu0
        %v912 = vpack.c.bf16 %v909, %v906
        %v913 = vsel %vm736, %v733, 0.0
        %914 = vadd.xlane.f32.xlu0 %v913
        %v915 = vpop.xlane.xlu0 %914
        %v916 = vmul.f32 %v915, 0.03125
        %v917 = vsub.f32 %v733, %v916
        %v918 = vmul.f32 %v917, %v917
        %v919 = vsel %vm736, %v918, 0.0
        %920 = vadd.xlane.f32.xlu0 %v919
        %v921 = vpop.xlane.xlu0 %920
        %v922 = vmul.f32 %v921, 0.03125
        %v923 = vadd.f32 %v922, 1e-05
        %v924 = vrsqrt.pop %v923
        %v925 = vmul.f32 %v917, %v924
        %v926 = vmul.f32 %v925, %v767
        %v927 = vadd.f32 %v926, %v775
        %v928 = vpack.c.bf16 %v927, %v927
        %v929 = vld [vmem:[#allocation10] sm:$0xf]
        %v930 = vld [vmem:[#allocation10 + $0x4] sm:$0xf]
        %v931 = vld [vmem:[#allocation10 + $0x8] sm:$0xf]
        %v932 = vld [vmem:[#allocation10 + $0xc] sm:$0xf]
        %v933 = vld [vmem:[#allocation11] sm:$0x1]
        %v935 = vlaneseq
        %v936 = vshrl.u32 %v935, 7
        %v937 = vsub.s32 0, %v936
        %v938 = vrot.slane %v933, %v937
        %v944 = vunpack.c.l.b16 %v929
        %v945 = vunpack.c.l.b16 %v930
        %v946 = vunpack.c.l.b16 %v931
        %v947 = vunpack.c.l.b16 %v932
        %v948 = vpack.c.b16 %v945, %v944
        %v949 = vpack.c.b16 %v947, %v946
        %v953 = vsel %vm736, %v928, 0
        %955 = vmatprep.subr.bf16.mxu0 0
        %956 = vmatpush1.bf16.msra.mxu0 0
        %957 = vmatprep.subr.bf16.mxu0 0
        %958 = vmatpush1.bf16.msra.mxu0 0
        %959 = vmatprep.subr.bf16.mxu0 0
        %960 = vmatpush1.bf16.msra.mxu0 0
        %961 = vmatprep.subr.bf16.mxu0 0
        %962 = vmatpush1.bf16.msra.mxu0 0
        %963 = vmatprep.subr.bf16.mxu0 0
        %964 = vmatpush1.bf16.msra.mxu0 0
        %965 = vmatprep.subr.bf16.mxu0 0
        %966 = vmatpush1.bf16.msra.mxu0 0
        %967 = vmatprep.subr.bf16.mxu0 0
        %968 = vmatpush1.bf16.msra.mxu0 %v949
        %969 = vmatprep.subr.bf16.mxu0 0
        %970 = vmatpush1.bf16.msra.mxu0 %v948
        %971 = vmatprep.subr.bf16.mxu0 0
        %972 = vmatpush2.bf16.msra.mxu0 0
        %973 = vmatprep.subr.bf16.mxu0 0
        %974 = vmatpush2.bf16.msra.mxu0 0
        %975 = vmatprep.subr.bf16.mxu0 0
        %976 = vmatpush2.bf16.msra.mxu0 0
        %977 = vmatprep.subr.bf16.mxu0 0
        %978 = vmatpush2.bf16.msra.mxu0 0
        %979 = vmatprep.subr.bf16.mxu0 0
        %980 = vmatpush2.bf16.msra.mxu0 0
        %981 = vmatprep.subr.bf16.mxu0 0
        %982 = vmatpush2.bf16.msra.mxu0 0
        %983 = vmatprep.subr.bf16.mxu0 0
        %984 = vmatpush2.bf16.msra.mxu0 0
        %985 = vmatprep.subr.bf16.mxu0 0
        %986 = vmatpush2.bf16.msra.mxu0 0
        %987 = vmatprep.mubr.bf16.mxu0 0
        %988 = vmatmul.mubr.bf16.gmra.mxu0 %v953
        %v989 = vpop.f32.mrf.mxu0
        %v990 = vadd.f32 %v938, %v989
        %v991 = vpop.f32.mrf.mxu0
        %v992 = vpop.f32.mrf.mxu0
        %v993 = vpop.f32.mrf.mxu0
        %994 = vdwg.mxu0
        %v995 = vpack.c.bf16 %v990, %v990
        %997 = vrot.lane.b32.xlu0 %v995, 120
        %v998 = vpop.permute.xlu0 %997
        %999 = vrot.lane.b32.xlu0 %v995, 112
        %v1000 = vpop.permute.xlu0 %999
        %1001 = vrot.lane.b32.xlu0 %v995, 104
        %v1002 = vpop.permute.xlu0 %1001
        %1004 = vrot.lane.b32.xlu0 %v847, 120
        %v1005 = vpop.permute.xlu0 %1004
        %1007 = vrot.lane.b32.xlu0 %v847, 112
        %v1008 = vpop.permute.xlu0 %1007
        %1010 = vrot.lane.b32.xlu0 %v847, 104
        %v1011 = vpop.permute.xlu0 %1010
        %1014 = vrot.lane.b32.xlu0 %v912, 120
        %v1015 = vpop.permute.xlu0 %1014
        %1017 = vrot.lane.b32.xlu0 %v912, 112
        %v1018 = vpop.permute.xlu0 %1017
        %1020 = vrot.lane.b32.xlu0 %v912, 104
        %v1021 = vpop.permute.xlu0 %1020
        %1023 = vxpose.xlu0.c.b16.start [1/8] %v847, 128
        %1024 = vxpose.xlu0.c.b16.cont [2/8] 0, 128
        %1025 = vxpose.xlu0.c.b16.cont [3/8] 0, 128
        %1026 = vxpose.xlu0.c.b16.cont [4/8] 0, 128
        %1027 = vxpose.xlu0.c.b16.cont [5/8] 0, 128
        %1028 = vxpose.xlu0.c.b16.cont [6/8] 0, 128
        %1029 = vxpose.xlu0.c.b16.cont [7/8] 0, 128
        %1030 = vxpose.xlu0.c.b16.end [8/8] 0, 128
        %v1031 = vpop.trf.xlu0
        %v1032 = vpop.trf.xlu0
        %v1033 = vpop.trf.xlu0
        %v1034 = vpop.trf.xlu0
        %v1035 = vpop.trf.xlu0
        %v1036 = vpop.trf.xlu0
        %v1037 = vpop.trf.xlu0
        %v1038 = vpop.trf.xlu0
        %1039 = vxpose.xlu0.c.b16.start [1/8] %v1005, 128
        %1040 = vxpose.xlu0.c.b16.cont [2/8] 0, 128
        %1041 = vxpose.xlu0.c.b16.cont [3/8] 0, 128
        %1042 = vxpose.xlu0.c.b16.cont [4/8] 0, 128
        %1043 = vxpose.xlu0.c.b16.cont [5/8] 0, 128
        %1044 = vxpose.xlu0.c.b16.cont [6/8] 0, 128
        %1045 = vxpose.xlu0.c.b16.cont [7/8] 0, 128
        %1046 = vxpose.xlu0.c.b16.end [8/8] 0, 128
        %v1047 = vpop.trf.xlu0
        %v1048 = vpop.trf.xlu0
        %v1049 = vpop.trf.xlu0
        %v1050 = vpop.trf.xlu0
        %v1051 = vpop.trf.xlu0
        %v1052 = vpop.trf.xlu0
        %v1053 = vpop.trf.xlu0
        %v1054 = vpop.trf.xlu0
        %1055 = vxpose.xlu0.c.b16.start [1/8] %v1008, 128
        %1056 = vxpose.xlu0.c.b16.cont [2/8] 0, 128
        %1057 = vxpose.xlu0.c.b16.cont [3/8] 0, 128
        %1058 = vxpose.xlu0.c.b16.cont [4/8] 0, 128
        %1059 = vxpose.xlu0.c.b16.cont [5/8] 0, 128
        %1060 = vxpose.xlu0.c.b16.cont [6/8] 0, 128
        %1061 = vxpose.xlu0.c.b16.cont [7/8] 0, 128
        %1062 = vxpose.xlu0.c.b16.end [8/8] 0, 128
        %v1063 = vpop.trf.xlu0
        %v1064 = vpop.trf.xlu0
        %v1065 = vpop.trf.xlu0
        %v1066 = vpop.trf.xlu0
        %v1067 = vpop.trf.xlu0
        %v1068 = vpop.trf.xlu0
        %v1069 = vpop.trf.xlu0
        %v1070 = vpop.trf.xlu0
        %1071 = vxpose.xlu0.c.b16.start [1/8] %v1011, 128
        %1072 = vxpose.xlu0.c.b16.cont [2/8] 0, 128
        %1073 = vxpose.xlu0.c.b16.cont [3/8] 0, 128
        %1074 = vxpose.xlu0.c.b16.cont [4/8] 0, 128
        %1075 = vxpose.xlu0.c.b16.cont [5/8] 0, 128
        %1076 = vxpose.xlu0.c.b16.cont [6/8] 0, 128
        %1077 = vxpose.xlu0.c.b16.cont [7/8] 0, 128
        %1078 = vxpose.xlu0.c.b16.end [8/8] 0, 128
        %v1079 = vpop.trf.xlu0
        %v1080 = vpop.trf.xlu0
        %v1081 = vpop.trf.xlu0
        %v1082 = vpop.trf.xlu0
        %v1083 = vpop.trf.xlu0
        %v1084 = vpop.trf.xlu0
        %v1085 = vpop.trf.xlu0
        %v1086 = vpop.trf.xlu0
        %vm1087 = vcmask 64512
        %v1089 = vsel %vm1087, %v995, 0
        %vm1091 = vcmask 1043456
        %v1093 = vsel %vm1091, %v1031, 0
        %1095 = vmatprep.subr.bf16.mxu0 0
        %1096 = vmatpush1.bf16.msra.mxu0 0
        %1097 = vmatprep.subr.bf16.mxu0 0
        %1098 = vmatpush1.bf16.msra.mxu0 0
        %1099 = vmatprep.subr.bf16.mxu0 0
        %1100 = vmatpush1.bf16.msra.mxu0 0
        %1101 = vmatprep.subr.bf16.mxu0 0
        %1102 = vmatpush1.bf16.msra.mxu0 0
        %1103 = vmatprep.subr.bf16.mxu0 0
        %1104 = vmatpush1.bf16.msra.mxu0 0
        %1105 = vmatprep.subr.bf16.mxu0 0
        %1106 = vmatpush1.bf16.msra.mxu0 0
        %1107 = vmatprep.subr.bf16.mxu0 0
        %1108 = vmatpush1.bf16.msra.mxu0 0
        %1109 = vmatprep.subr.bf16.mxu0 0
        %1110 = vmatpush1.bf16.msra.mxu0 %v1093
        %1111 = vmatprep.subr.bf16.mxu0 0
        %1112 = vmatpush2.bf16.msra.mxu0 0
        %1113 = vmatprep.subr.bf16.mxu0 0
        %1114 = vmatpush2.bf16.msra.mxu0 0
        %1115 = vmatprep.subr.bf16.mxu0 0
        %1116 = vmatpush2.bf16.msra.mxu0 0
        %1117 = vmatprep.subr.bf16.mxu0 0
        %1118 = vmatpush2.bf16.msra.mxu0 0
        %1119 = vmatprep.subr.bf16.mxu0 0
        %1120 = vmatpush2.bf16.msra.mxu0 0
        %1121 = vmatprep.subr.bf16.mxu0 0
        %1122 = vmatpush2.bf16.msra.mxu0 0
        %1123 = vmatprep.subr.bf16.mxu0 0
        %1124 = vmatpush2.bf16.msra.mxu0 0
        %1125 = vmatprep.subr.bf16.mxu0 0
        %1126 = vmatpush2.bf16.msra.mxu0 0
        %1127 = vmatprep.mubr.bf16.mxu0 0
        %1128 = vmatmul.mubr.bf16.gmra.mxu0 %v1089
        %v1129 = vpop.f32.mrf.mxu0
        %v1130 = vadd.f32 0.0, %v1129
        %v1131 = vpop.f32.mrf.mxu0
        %v1132 = vpop.f32.mrf.mxu0
        %v1133 = vpop.f32.mrf.mxu0
        %1134 = vdwg.mxu0
        %v1136 = vsel %vm1087, %v998, 0
        %v1139 = vsel %vm1091, %v1047, 0
        %1141 = vmatprep.subr.bf16.mxu0 0
        %1142 = vmatpush1.bf16.msra.mxu0 0
        %1143 = vmatprep.subr.bf16.mxu0 0
        %1144 = vmatpush1.bf16.msra.mxu0 0
        %1145 = vmatprep.subr.bf16.mxu0 0
        %1146 = vmatpush1.bf16.msra.mxu0 0
        %1147 = vmatprep.subr.bf16.mxu0 0
        %1148 = vmatpush1.bf16.msra.mxu0 0
        %1149 = vmatprep.subr.bf16.mxu0 0
        %1150 = vmatpush1.bf16.msra.mxu0 0
        %1151 = vmatprep.subr.bf16.mxu0 0
        %1152 = vmatpush1.bf16.msra.mxu0 0
        %1153 = vmatprep.subr.bf16.mxu0 0
        %1154 = vmatpush1.bf16.msra.mxu0 0
        %1155 = vmatprep.subr.bf16.mxu0 0
        %1156 = vmatpush1.bf16.msra.mxu0 %v1139
        %1157 = vmatprep.subr.bf16.mxu0 0
        %1158 = vmatpush2.bf16.msra.mxu0 0
        %1159 = vmatprep.subr.bf16.mxu0 0
        %1160 = vmatpush2.bf16.msra.mxu0 0
        %1161 = vmatprep.subr.bf16.mxu0 0
        %1162 = vmatpush2.bf16.msra.mxu0 0
        %1163 = vmatprep.subr.bf16.mxu0 0
        %1164 = vmatpush2.bf16.msra.mxu0 0
        %1165 = vmatprep.subr.bf16.mxu0 0
        %1166 = vmatpush2.bf16.msra.mxu0 0
        %1167 = vmatprep.subr.bf16.mxu0 0
        %1168 = vmatpush2.bf16.msra.mxu0 0
        %1169 = vmatprep.subr.bf16.mxu0 0
        %1170 = vmatpush2.bf16.msra.mxu0 0
        %1171 = vmatprep.subr.bf16.mxu0 0
        %1172 = vmatpush2.bf16.msra.mxu0 0
        %1173 = vmatprep.mubr.bf16.mxu0 0
        %1174 = vmatmul.mubr.bf16.gmra.mxu0 %v1136
        %v1175 = vpop.f32.mrf.mxu0
        %v1176 = vadd.f32 0.0, %v1175
        %v1177 = vpop.f32.mrf.mxu0
        %v1178 = vpop.f32.mrf.mxu0
        %v1179 = vpop.f32.mrf.mxu0
        %1180 = vdwg.mxu0
        %v1182 = vsel %vm1087, %v1000, 0
        %v1185 = vsel %vm1091, %v1063, 0
        %1187 = vmatprep.subr.bf16.mxu0 0
        %1188 = vmatpush1.bf16.msra.mxu0 0
        %1189 = vmatprep.subr.bf16.mxu0 0
        %1190 = vmatpush1.bf16.msra.mxu0 0
        %1191 = vmatprep.subr.bf16.mxu0 0
        %1192 = vmatpush1.bf16.msra.mxu0 0
        %1193 = vmatprep.subr.bf16.mxu0 0
        %1194 = vmatpush1.bf16.msra.mxu0 0
        %1195 = vmatprep.subr.bf16.mxu0 0
        %1196 = vmatpush1.bf16.msra.mxu0 0
        %1197 = vmatprep.subr.bf16.mxu0 0
        %1198 = vmatpush1.bf16.msra.mxu0 0
        %1199 = vmatprep.subr.bf16.mxu0 0
        %1200 = vmatpush1.bf16.msra.mxu0 0
        %1201 = vmatprep.subr.bf16.mxu0 0
        %1202 = vmatpush1.bf16.msra.mxu0 %v1185
        %1203 = vmatprep.subr.bf16.mxu0 0
        %1204 = vmatpush2.bf16.msra.mxu0 0
        %1205 = vmatprep.subr.bf16.mxu0 0
        %1206 = vmatpush2.bf16.msra.mxu0 0
        %1207 = vmatprep.subr.bf16.mxu0 0
        %1208 = vmatpush2.bf16.msra.mxu0 0
        %1209 = vmatprep.subr.bf16.mxu0 0
        %1210 = vmatpush2.bf16.msra.mxu0 0
        %1211 = vmatprep.subr.bf16.mxu0 0
        %1212 = vmatpush2.bf16.msra.mxu0 0
        %1213 = vmatprep.subr.bf16.mxu0 0
        %1214 = vmatpush2.bf16.msra.mxu0 0
        %1215 = vmatprep.subr.bf16.mxu0 0
        %1216 = vmatpush2.bf16.msra.mxu0 0
        %1217 = vmatprep.subr.bf16.mxu0 0
        %1218 = vmatpush2.bf16.msra.mxu0 0
        %1219 = vmatprep.mubr.bf16.mxu0 0
        %1220 = vmatmul.mubr.bf16.gmra.mxu0 %v1182
        %v1221 = vpop.f32.mrf.mxu0
        %v1222 = vadd.f32 0.0, %v1221
        %v1223 = vpop.f32.mrf.mxu0
        %v1224 = vpop.f32.mrf.mxu0
        %v1225 = vpop.f32.mrf.mxu0
        %1226 = vdwg.mxu0
        %v1228 = vsel %vm1087, %v1002, 0
        %v1231 = vsel %vm1091, %v1079, 0
        %1233 = vmatprep.subr.bf16.mxu0 0
        %1234 = vmatpush1.bf16.msra.mxu0 0
        %1235 = vmatprep.subr.bf16.mxu0 0
        %1236 = vmatpush1.bf16.msra.mxu0 0
        %1237 = vmatprep.subr.bf16.mxu0 0
        %1238 = vmatpush1.bf16.msra.mxu0 0
        %1239 = vmatprep.subr.bf16.mxu0 0
        %1240 = vmatpush1.bf16.msra.mxu0 0
        %1241 = vmatprep.subr.bf16.mxu0 0
        %1242 = vmatpush1.bf16.msra.mxu0 0
        %1243 = vmatprep.subr.bf16.mxu0 0
        %1244 = vmatpush1.bf16.msra.mxu0 0
        %1245 = vmatprep.subr.bf16.mxu0 0
        %1246 = vmatpush1.bf16.msra.mxu0 0
        %1247 = vmatprep.subr.bf16.mxu0 0
        %1248 = vmatpush1.bf16.msra.mxu0 %v1231
        %1249 = vmatprep.subr.bf16.mxu0 0
        %1250 = vmatpush2.bf16.msra.mxu0 0
        %1251 = vmatprep.subr.bf16.mxu0 0
        %1252 = vmatpush2.bf16.msra.mxu0 0
        %1253 = vmatprep.subr.bf16.mxu0 0
        %1254 = vmatpush2.bf16.msra.mxu0 0
        %1255 = vmatprep.subr.bf16.mxu0 0
        %1256 = vmatpush2.bf16.msra.mxu0 0
        %1257 = vmatprep.subr.bf16.mxu0 0
        %1258 = vmatpush2.bf16.msra.mxu0 0
        %1259 = vmatprep.subr.bf16.mxu0 0
        %1260 = vmatpush2.bf16.msra.mxu0 0
        %1261 = vmatprep.subr.bf16.mxu0 0
        %1262 = vmatpush2.bf16.msra.mxu0 0
        %1263 = vmatprep.subr.bf16.mxu0 0
        %1264 = vmatpush2.bf16.msra.mxu0 0
        %1265 = vmatprep.mubr.bf16.mxu0 0
        %1266 = vmatmul.mubr.bf16.gmra.mxu0 %v1228
        %v1267 = vpop.f32.mrf.mxu0
        %v1268 = vadd.f32 0.0, %v1267
        %v1269 = vpop.f32.mrf.mxu0
        %v1270 = vpop.f32.mrf.mxu0
        %v1271 = vpop.f32.mrf.mxu0
        %1272 = vdwg.mxu0
        %vm1273 = vcmask 130048
        %v1274 = vsel %vm1273, %v1130, -inf
        %1275 = vmax.xlane.f32.xlu0 %v1274
        %v1276 = vpop.xlane.xlu0 %1275
        %v1277 = vsel %vm1273, %v1176, -inf
        %1278 = vmax.xlane.f32.xlu0 %v1277
        %v1279 = vpop.xlane.xlu0 %1278
        %v1280 = vsel %vm1273, %v1222, -inf
        %1281 = vmax.xlane.f32.xlu0 %v1280
        %v1282 = vpop.xlane.xlu0 %1281
        %v1283 = vsel %vm1273, %v1268, -inf
        %1284 = vmax.xlane.f32.xlu0 %v1283
        %v1285 = vpop.xlane.xlu0 %1284
        %v1286 = vsub.f32 %v1130, %v1276
        %v1287 = vsub.f32 %v1176, %v1279
        %v1288 = vsub.f32 %v1222, %v1282
        %v1289 = vsub.f32 %v1268, %v1285
        %v1290 = vmul.f32 %v1286, 1.442695
        %v1291 = vpow.pop %v1290
        %v1292 = vmul.f32 %v1287, 1.442695
        %v1293 = vpow.pop %v1292
        %v1294 = vmul.f32 %v1288, 1.442695
        %v1295 = vpow.pop %v1294
        %v1296 = vmul.f32 %v1289, 1.442695
        %v1297 = vpow.pop %v1296
        %v1298 = vsel %vm1273, %v1291, 0.0
        %1299 = vadd.xlane.f32.xlu0 %v1298
        %v1300 = vpop.xlane.xlu0 %1299
        %v1301 = vsel %vm1273, %v1293, 0.0
        %1302 = vadd.xlane.f32.xlu0 %v1301
        %v1303 = vpop.xlane.xlu0 %1302
        %v1304 = vsel %vm1273, %v1295, 0.0
        %1305 = vadd.xlane.f32.xlu0 %v1304
        %v1306 = vpop.xlane.xlu0 %1305
        %v1307 = vsel %vm1273, %v1297, 0.0
        %1308 = vadd.xlane.f32.xlu0 %v1307
        %v1309 = vpop.xlane.xlu0 %1308
        %v1310 = vrcp.pop %v1300
        %v1311 = vrcp.pop %v1303
        %v1312 = vrcp.pop %v1306
        %v1313 = vrcp.pop %v1309
        %v1314 = vmul.f32 %v1291, %v1310
        %v1315 = vmul.f32 %v1293, %v1311
        %v1316 = vmul.f32 %v1295, %v1312
        %v1317 = vmul.f32 %v1297, %v1313
        %v1318 = vpack.c.bf16 %v1314, %v1314
        %v1319 = vpack.c.bf16 %v1315, %v1315
        %v1320 = vpack.c.bf16 %v1316, %v1316
        %v1321 = vpack.c.bf16 %v1317, %v1317
        %v1323 = vsel %vm1273, %v1318, 0
        %1325 = vmatprep.subr.bf16.mxu0 0
        %1326 = vmatpush1.bf16.msra.mxu0 0
        %1327 = vmatprep.subr.bf16.mxu0 0
        %1328 = vmatpush1.bf16.msra.mxu0 0
        %1329 = vmatprep.subr.bf16.mxu0 0
        %1330 = vmatpush1.bf16.msra.mxu0 0
        %1331 = vmatprep.subr.bf16.mxu0 0
        %1332 = vmatpush1.bf16.msra.mxu0 0
        %1333 = vmatprep.subr.bf16.mxu0 0
        %1334 = vmatpush1.bf16.msra.mxu0 0
        %1335 = vmatprep.subr.bf16.mxu0 0
        %1336 = vmatpush1.bf16.msra.mxu0 0
        %1337 = vmatprep.subr.bf16.mxu0 0
        %1338 = vmatpush1.bf16.msra.mxu0 0
        %1339 = vmatprep.subr.bf16.mxu0 0
        %1340 = vmatpush1.bf16.msra.mxu0 %v912
        %1341 = vmatprep.subr.bf16.mxu0 0
        %1342 = vmatpush2.bf16.msra.mxu0 0
        %1343 = vmatprep.subr.bf16.mxu0 0
        %1344 = vmatpush2.bf16.msra.mxu0 0
        %1345 = vmatprep.subr.bf16.mxu0 0
        %1346 = vmatpush2.bf16.msra.mxu0 0
        %1347 = vmatprep.subr.bf16.mxu0 0
        %1348 = vmatpush2.bf16.msra.mxu0 0
        %1349 = vmatprep.subr.bf16.mxu0 0
        %1350 = vmatpush2.bf16.msra.mxu0 0
        %1351 = vmatprep.subr.bf16.mxu0 0
        %1352 = vmatpush2.bf16.msra.mxu0 0
        %1353 = vmatprep.subr.bf16.mxu0 0
        %1354 = vmatpush2.bf16.msra.mxu0 0
        %1355 = vmatprep.subr.bf16.mxu0 0
        %1356 = vmatpush2.bf16.msra.mxu0 0
        %1357 = vmatprep.mubr.bf16.mxu0 0
        %1358 = vmatmul.mubr.bf16.gmra.mxu0 %v1323
        %v1359 = vpop.f32.mrf.mxu0
        %v1360 = vadd.f32 0.0, %v1359
        %v1361 = vpop.f32.mrf.mxu0
        %v1362 = vpop.f32.mrf.mxu0
        %v1363 = vpop.f32.mrf.mxu0
        %1364 = vdwg.mxu0
        %v1366 = vsel %vm1273, %v1319, 0
        %1368 = vmatprep.subr.bf16.mxu0 0
        %1369 = vmatpush1.bf16.msra.mxu0 0
        %1370 = vmatprep.subr.bf16.mxu0 0
        %1371 = vmatpush1.bf16.msra.mxu0 0
        %1372 = vmatprep.subr.bf16.mxu0 0
        %1373 = vmatpush1.bf16.msra.mxu0 0
        %1374 = vmatprep.subr.bf16.mxu0 0
        %1375 = vmatpush1.bf16.msra.mxu0 0
        %1376 = vmatprep.subr.bf16.mxu0 0
        %1377 = vmatpush1.bf16.msra.mxu0 0
        %1378 = vmatprep.subr.bf16.mxu0 0
        %1379 = vmatpush1.bf16.msra.mxu0 0
        %1380 = vmatprep.subr.bf16.mxu0 0
        %1381 = vmatpush1.bf16.msra.mxu0 0
        %1382 = vmatprep.subr.bf16.mxu0 0
        %1383 = vmatpush1.bf16.msra.mxu0 %v1015
        %1384 = vmatprep.subr.bf16.mxu0 0
        %1385 = vmatpush2.bf16.msra.mxu0 0
        %1386 = vmatprep.subr.bf16.mxu0 0
        %1387 = vmatpush2.bf16.msra.mxu0 0
        %1388 = vmatprep.subr.bf16.mxu0 0
        %1389 = vmatpush2.bf16.msra.mxu0 0
        %1390 = vmatprep.subr.bf16.mxu0 0
        %1391 = vmatpush2.bf16.msra.mxu0 0
        %1392 = vmatprep.subr.bf16.mxu0 0
        %1393 = vmatpush2.bf16.msra.mxu0 0
        %1394 = vmatprep.subr.bf16.mxu0 0
        %1395 = vmatpush2.bf16.msra.mxu0 0
        %1396 = vmatprep.subr.bf16.mxu0 0
        %1397 = vmatpush2.bf16.msra.mxu0 0
        %1398 = vmatprep.subr.bf16.mxu0 0
        %1399 = vmatpush2.bf16.msra.mxu0 0
        %1400 = vmatprep.mubr.bf16.mxu0 0
        %1401 = vmatmul.mubr.bf16.gmra.mxu0 %v1366
        %v1402 = vpop.f32.mrf.mxu0
        %v1403 = vadd.f32 0.0, %v1402
        %v1404 = vpop.f32.mrf.mxu0
        %v1405 = vpop.f32.mrf.mxu0
        %v1406 = vpop.f32.mrf.mxu0
        %1407 = vdwg.mxu0
        %v1409 = vsel %vm1273, %v1320, 0
        %1411 = vmatprep.subr.bf16.mxu0 0
        %1412 = vmatpush1.bf16.msra.mxu0 0
        %1413 = vmatprep.subr.bf16.mxu0 0
        %1414 = vmatpush1.bf16.msra.mxu0 0
        %1415 = vmatprep.subr.bf16.mxu0 0
        %1416 = vmatpush1.bf16.msra.mxu0 0
        %1417 = vmatprep.subr.bf16.mxu0 0
        %1418 = vmatpush1.bf16.msra.mxu0 0
        %1419 = vmatprep.subr.bf16.mxu0 0
        %1420 = vmatpush1.bf16.msra.mxu0 0
        %1421 = vmatprep.subr.bf16.mxu0 0
        %1422 = vmatpush1.bf16.msra.mxu0 0
        %1423 = vmatprep.subr.bf16.mxu0 0
        %1424 = vmatpush1.bf16.msra.mxu0 0
        %1425 = vmatprep.subr.bf16.mxu0 0
        %1426 = vmatpush1.bf16.msra.mxu0 %v1018
        %1427 = vmatprep.subr.bf16.mxu0 0
        %1428 = vmatpush2.bf16.msra.mxu0 0
        %1429 = vmatprep.subr.bf16.mxu0 0
        %1430 = vmatpush2.bf16.msra.mxu0 0
        %1431 = vmatprep.subr.bf16.mxu0 0
        %1432 = vmatpush2.bf16.msra.mxu0 0
        %1433 = vmatprep.subr.bf16.mxu0 0
        %1434 = vmatpush2.bf16.msra.mxu0 0
        %1435 = vmatprep.subr.bf16.mxu0 0
        %1436 = vmatpush2.bf16.msra.mxu0 0
        %1437 = vmatprep.subr.bf16.mxu0 0
        %1438 = vmatpush2.bf16.msra.mxu0 0
        %1439 = vmatprep.subr.bf16.mxu0 0
        %1440 = vmatpush2.bf16.msra.mxu0 0
        %1441 = vmatprep.subr.bf16.mxu0 0
        %1442 = vmatpush2.bf16.msra.mxu0 0
        %1443 = vmatprep.mubr.bf16.mxu0 0
        %1444 = vmatmul.mubr.bf16.gmra.mxu0 %v1409
        %v1445 = vpop.f32.mrf.mxu0
        %v1446 = vadd.f32 0.0, %v1445
        %v1447 = vpop.f32.mrf.mxu0
        %v1448 = vpop.f32.mrf.mxu0
        %v1449 = vpop.f32.mrf.mxu0
        %1450 = vdwg.mxu0
        %v1452 = vsel %vm1273, %v1321, 0
        %1454 = vmatprep.subr.bf16.mxu0 0
        %1455 = vmatpush1.bf16.msra.mxu0 0
        %1456 = vmatprep.subr.bf16.mxu0 0
        %1457 = vmatpush1.bf16.msra.mxu0 0
        %1458 = vmatprep.subr.bf16.mxu0 0
        %1459 = vmatpush1.bf16.msra.mxu0 0
        %1460 = vmatprep.subr.bf16.mxu0 0
        %1461 = vmatpush1.bf16.msra.mxu0 0
        %1462 = vmatprep.subr.bf16.mxu0 0
        %1463 = vmatpush1.bf16.msra.mxu0 0
        %1464 = vmatprep.subr.bf16.mxu0 0
        %1465 = vmatpush1.bf16.msra.mxu0 0
        %1466 = vmatprep.subr.bf16.mxu0 0
        %1467 = vmatpush1.bf16.msra.mxu0 0
        %1468 = vmatprep.subr.bf16.mxu0 0
        %1469 = vmatpush1.bf16.msra.mxu0 %v1021
        %1470 = vmatprep.subr.bf16.mxu0 0
        %1471 = vmatpush2.bf16.msra.mxu0 0
        %1472 = vmatprep.subr.bf16.mxu0 0
        %1473 = vmatpush2.bf16.msra.mxu0 0
        %1474 = vmatprep.subr.bf16.mxu0 0
        %1475 = vmatpush2.bf16.msra.mxu0 0
        %1476 = vmatprep.subr.bf16.mxu0 0
        %1477 = vmatpush2.bf16.msra.mxu0 0
        %1478 = vmatprep.subr.bf16.mxu0 0
        %1479 = vmatpush2.bf16.msra.mxu0 0
        %1480 = vmatprep.subr.bf16.mxu0 0
        %1481 = vmatpush2.bf16.msra.mxu0 0
        %1482 = vmatprep.subr.bf16.mxu0 0
        %1483 = vmatpush2.bf16.msra.mxu0 0
        %1484 = vmatprep.subr.bf16.mxu0 0
        %1485 = vmatpush2.bf16.msra.mxu0 0
        %1486 = vmatprep.mubr.bf16.mxu0 0
        %1487 = vmatmul.mubr.bf16.gmra.mxu0 %v1452
        %v1488 = vpop.f32.mrf.mxu0
        %v1489 = vadd.f32 0.0, %v1488
        %v1490 = vpop.f32.mrf.mxu0
        %v1491 = vpop.f32.mrf.mxu0
        %v1492 = vpop.f32.mrf.mxu0
        %1493 = vdwg.mxu0
        %v1494 = vpack.c.bf16 %v1360, %v1360
        %v1496 = vunpack.c.l.s4 1983009808
        %v1497 = vunpack.c.0.s8 %v1496
        %v1498 = vlaneseq
        %v1499 = vshrl.u32 %v1498, 7
        %v1500 = vsub.s32 %v1497, %v1499
        %v1501 = vrot.slane %v1494, %v1500
        %v1502 = vpack.c.bf16 %v1446, %v1446
        %v1504 = vunpack.c.l.s4 1983009808
        %v1505 = vunpack.c.0.s8 %v1504
        %v1506 = vlaneseq
        %v1507 = vshrl.u32 %v1506, 7
        %v1508 = vsub.s32 %v1505, %v1507
        %v1509 = vrot.slane %v1502, %v1508
        %v1510 = vcombine.low %v1501, %v1509
        %v1511 = vcombine.high %v1501, %v1509
        %v1513 = vunpack.c.l.s4 1934713408
        %v1514 = vunpack.c.0.s8 %v1513
        %v1515 = vlaneseq
        %v1516 = vshrl.u32 %v1515, 7
        %v1517 = vsub.s32 %v1514, %v1516
        %v1518 = vrot.slane %v1510, %v1517
        %v1520 = vunpack.c.l.s4 1934713408
        %v1521 = vunpack.c.0.s8 %v1520
        %v1522 = vlaneseq
        %v1523 = vshrl.u32 %v1522, 7
        %v1524 = vsub.s32 %v1521, %v1523
        %v1525 = vrot.slane %v1511, %v1524
        %v1526 = vcombine.high %v1518, 0
        %v1527 = vcombine.high %v1525, 0
        %v1528 = vpack.c.bf16 %v1403, %v1403
        %v1530 = vunpack.c.l.s4 1983009808
        %v1531 = vunpack.c.0.s8 %v1530
        %v1532 = vlaneseq
        %v1533 = vshrl.u32 %v1532, 7
        %v1534 = vsub.s32 %v1531, %v1533
        %v1535 = vrot.slane %v1528, %v1534
        %v1536 = vpack.c.bf16 %v1489, %v1489
        %v1538 = vunpack.c.l.s4 1983009808
        %v1539 = vunpack.c.0.s8 %v1538
        %v1540 = vlaneseq
        %v1541 = vshrl.u32 %v1540, 7
        %v1542 = vsub.s32 %v1539, %v1541
        %v1543 = vrot.slane %v1536, %v1542
        %v1544 = vcombine.low %v1535, %v1543
        %v1545 = vcombine.high %v1535, %v1543
        %v1547 = vunpack.c.l.s4 1934713408
        %v1548 = vunpack.c.0.s8 %v1547
        %v1549 = vlaneseq
        %v1550 = vshrl.u32 %v1549, 7
        %v1551 = vsub.s32 %v1548, %v1550
        %v1552 = vrot.slane %v1544, %v1551
        %v1554 = vunpack.c.l.s4 1934713408
        %v1555 = vunpack.c.0.s8 %v1554
        %v1556 = vlaneseq
        %v1557 = vshrl.u32 %v1556, 7
        %v1558 = vsub.s32 %v1555, %v1557
        %v1559 = vrot.slane %v1545, %v1558
        %v1560 = vcombine.high %v1552, 0
        %v1561 = vcombine.high %v1559, 0
        %v1564 = vpack.i.b16 %v1552, %v1518
        %v1566 = vshrl.u32 %v1518, 16
        %v1567 = vshrl.u32 %v1552, 16
        %v1568 = vpack.i.b16 %v1567, %v1566
        %v1572 = vpack.i.b16 %v1560, %v1526
        %v1574 = vshrl.u32 %v1526, 16
        %v1575 = vshrl.u32 %v1560, 16
        %v1576 = vpack.i.b16 %v1575, %v1574
        %v1580 = vpack.i.b16 %v1559, %v1525
        %v1582 = vshrl.u32 %v1525, 16
        %v1583 = vshrl.u32 %v1559, 16
        %v1584 = vpack.i.b16 %v1583, %v1582
        %v1588 = vpack.i.b16 %v1561, %v1527
        %v1590 = vshrl.u32 %v1527, 16
        %v1591 = vshrl.u32 %v1561, 16
        %v1592 = vpack.i.b16 %v1591, %v1590
        %v1594 = vcombine.low %v1564, %v1580
        %v1596 = vunpack.c.l.s4 1983009808
        %v1597 = vunpack.c.0.s8 %v1596
        %v1598 = vlaneseq
        %v1599 = vshrl.u32 %v1598, 7
        %v1600 = vsub.s32 %v1597, %v1599
        %v1601 = vrot.slane %v1594, %v1600
        %v1602 = vcombine.low %v1572, %v1588
        %v1604 = vunpack.c.l.s4 1983009808
        %v1605 = vunpack.c.0.s8 %v1604
        %v1606 = vlaneseq
        %v1607 = vshrl.u32 %v1606, 7
        %v1608 = vsub.s32 %v1605, %v1607
        %v1609 = vrot.slane %v1602, %v1608
        %v1610 = vcombine.low %v1601, %v1609
        %v1612 = vunpack.c.l.s4 1934713408
        %v1613 = vunpack.c.0.s8 %v1612
        %v1614 = vlaneseq
        %v1615 = vshrl.u32 %v1614, 7
        %v1616 = vsub.s32 %v1613, %v1615
        %v1617 = vrot.slane %v1610, %v1616
        %v1618 = vcombine.high %v1617, 0
        %v1619 = vcombine.low %v1568, %v1584
        %v1621 = vunpack.c.l.s4 1983009808
        %v1622 = vunpack.c.0.s8 %v1621
        %v1623 = vlaneseq
        %v1624 = vshrl.u32 %v1623, 7
        %v1625 = vsub.s32 %v1622, %v1624
        %v1626 = vrot.slane %v1619, %v1625
        %v1627 = vcombine.low %v1576, %v1592
        %v1629 = vunpack.c.l.s4 1983009808
        %v1630 = vunpack.c.0.s8 %v1629
        %v1631 = vlaneseq
        %v1632 = vshrl.u32 %v1631, 7
        %v1633 = vsub.s32 %v1630, %v1632
        %v1634 = vrot.slane %v1627, %v1633
        %v1635 = vcombine.low %v1626, %v1634
        %v1637 = vunpack.c.l.s4 1934713408
        %v1638 = vunpack.c.0.s8 %v1637
        %v1639 = vlaneseq
        %v1640 = vshrl.u32 %v1639, 7
        %v1641 = vsub.s32 %v1638, %v1640
        %v1642 = vrot.slane %v1635, %v1641
        %v1643 = vcombine.high %v1642, 0
        %v1646 = vpack.i.b16 %v1642, %v1617
        %v1647 = vshrl.u32 %v1617, 16
        %v1648 = vshrl.u32 %v1642, 16
        %v1649 = vpack.i.b16 %v1648, %v1647
        %v1652 = vpack.i.b16 %v1643, %v1618
        %v1653 = vshrl.u32 %v1618, 16
        %v1654 = vshrl.u32 %v1643, 16
        %v1655 = vpack.i.b16 %v1654, %v1653
        %1656 = vrot.lane.b32.xlu0 %v1649, 8
        %v1657 = vpop.permute.xlu0 %1656
        %1658 = vrot.lane.b32.xlu0 %v1652, 16
        %v1659 = vpop.permute.xlu0 %1658
        %1660 = vrot.lane.b32.xlu0 %v1655, 24
        %v1661 = vpop.permute.xlu0 %1660
        %v1664 = vsel %vm1087, %v1646, %v1657
        %v1666 = vsel %vm1273, %v1664, %v1659
        %vm1667 = vcmask 195584
        %v1669 = vsel %vm1667, %v1666, %v1661
        %v1670 = vld [vmem:[%s10] sm:$0xf]
        %v1671 = vld [vmem:[%s10 + $0x4] sm:$0xf]
        %v1672 = vld [vmem:[%s10 + $0x8] sm:$0xf]
        %v1673 = vld [vmem:[%s10 + $0xc] sm:$0xf]
        %v1674 = vld [vmem:[%s11] sm:$0x1]
        %v1676 = vlaneseq
        %v1677 = vshrl.u32 %v1676, 7
        %v1678 = vsub.s32 0, %v1677
        %v1679 = vrot.slane %v1674, %v1678
        %v1685 = vunpack.c.l.b16 %v1670
        %v1686 = vunpack.c.l.b16 %v1671
        %v1687 = vunpack.c.l.b16 %v1672
        %v1688 = vunpack.c.l.b16 %v1673
        %v1689 = vpack.c.b16 %v1686, %v1685
        %v1690 = vpack.c.b16 %v1688, %v1687
        %v1693 = vsel %vm736, %v1669, 0
        %1695 = vmatprep.subr.bf16.mxu0 0
        %1696 = vmatpush1.bf16.msra.mxu0 0
        %1697 = vmatprep.subr.bf16.mxu0 0
        %1698 = vmatpush1.bf16.msra.mxu0 0
        %1699 = vmatprep.subr.bf16.mxu0 0
        %1700 = vmatpush1.bf16.msra.mxu0 0
        %1701 = vmatprep.subr.bf16.mxu0 0
        %1702 = vmatpush1.bf16.msra.mxu0 0
        %1703 = vmatprep.subr.bf16.mxu0 0
        %1704 = vmatpush1.bf16.msra.mxu0 0
        %1705 = vmatprep.subr.bf16.mxu0 0
        %1706 = vmatpush1.bf16.msra.mxu0 0
        %1707 = vmatprep.subr.bf16.mxu0 0
        %1708 = vmatpush1.bf16.msra.mxu0 %v1690
        %1709 = vmatprep.subr.bf16.mxu0 0
        %1710 = vmatpush1.bf16.msra.mxu0 %v1689
        %1711 = vmatprep.subr.bf16.mxu0 0
        %1712 = vmatpush2.bf16.msra.mxu0 0
        %1713 = vmatprep.subr.bf16.mxu0 0
        %1714 = vmatpush2.bf16.msra.mxu0 0
        %1715 = vmatprep.subr.bf16.mxu0 0
        %1716 = vmatpush2.bf16.msra.mxu0 0
        %1717 = vmatprep.subr.bf16.mxu0 0
        %1718 = vmatpush2.bf16.msra.mxu0 0
        %1719 = vmatprep.subr.bf16.mxu0 0
        %1720 = vmatpush2.bf16.msra.mxu0 0
        %1721 = vmatprep.subr.bf16.mxu0 0
        %1722 = vmatpush2.bf16.msra.mxu0 0
        %1723 = vmatprep.subr.bf16.mxu0 0
        %1724 = vmatpush2.bf16.msra.mxu0 0
        %1725 = vmatprep.subr.bf16.mxu0 0
        %1726 = vmatpush2.bf16.msra.mxu0 0
        %1727 = vmatprep.mubr.bf16.mxu0 0
        %1728 = vmatmul.mubr.bf16.gmra.mxu0 %v1693
        %v1729 = vpop.f32.mrf.mxu0
        %v1730 = vadd.f32 %v1679, %v1729
        %v1731 = vpop.f32.mrf.mxu0
        %v1732 = vpop.f32.mrf.mxu0
        %v1733 = vpop.f32.mrf.mxu0
        %1734 = vdwg.mxu0
        %v1735 = vadd.f32 %v1730, %v733
        %v1736 = vsel %vm736, %v1735, 0.0
        %1737 = vadd.xlane.f32.xlu0 %v1736
        %v1738 = vpop.xlane.xlu0 %1737
        %v1739 = vmul.f32 %v1738, 0.03125
        %v1740 = vsub.f32 %v1735, %v1739
        %v1741 = vmul.f32 %v1740, %v1740
        %v1742 = vsel %vm736, %v1741, 0.0
        %1743 = vadd.xlane.f32.xlu0 %v1742
        %v1744 = vpop.xlane.xlu0 %1743
        %v1745 = vmul.f32 %v1744, 0.03125
        %v1746 = vadd.f32 %v1745, 1e-05
        %v1747 = vrsqrt.pop %v1746
        %v1748 = vmul.f32 %v1740, %v1747
        %v1749 = vmul.f32 %v1748, %v767
        %v1750 = vadd.f32 %v1749, %v775
        %v1751 = vpack.c.bf16 %v1750, %v1750
        %v1752 = vld [vmem:[#allocation19] sm:$0xf]
        %v1753 = vld [vmem:[#allocation19 + $0x4] sm:$0xf]
        %v1754 = vld [vmem:[#allocation19 + $0x8] sm:$0xf]
        %v1755 = vld [vmem:[#allocation19 + $0xc] sm:$0xf]
        %v1756 = vld [vmem:[%s13] sm:$0x1]
        %v1758 = vlaneseq
        %v1759 = vshrl.u32 %v1758, 7
        %v1760 = vsub.s32 0, %v1759
        %v1761 = vrot.slane %v1756, %v1760
        %v1767 = vunpack.c.l.b16 %v1752
        %v1768 = vunpack.c.l.b16 %v1753
        %v1769 = vunpack.c.l.b16 %v1754
        %v1770 = vunpack.c.l.b16 %v1755
        %v1771 = vpack.c.b16 %v1768, %v1767
        %v1772 = vpack.c.b16 %v1770, %v1769
        %v1776 = vsel %vm736, %v1751, 0
        %1778 = vmatprep.subr.bf16.mxu0 0
        %1779 = vmatpush1.bf16.msra.mxu0 0
        %1780 = vmatprep.subr.bf16.mxu0 0
        %1781 = vmatpush1.bf16.msra.mxu0 0
        %1782 = vmatprep.subr.bf16.mxu0 0
        %1783 = vmatpush1.bf16.msra.mxu0 0
        %1784 = vmatprep.subr.bf16.mxu0 0
        %1785 = vmatpush1.bf16.msra.mxu0 0
        %1786 = vmatprep.subr.bf16.mxu0 0
        %1787 = vmatpush1.bf16.msra.mxu0 0
        %1788 = vmatprep.subr.bf16.mxu0 0
        %1789 = vmatpush1.bf16.msra.mxu0 0
        %1790 = vmatprep.subr.bf16.mxu0 0
        %1791 = vmatpush1.bf16.msra.mxu0 %v1772
        %1792 = vmatprep.subr.bf16.mxu0 0
        %1793 = vmatpush1.bf16.msra.mxu0 %v1771
        %1794 = vmatprep.subr.bf16.mxu0 0
        %1795 = vmatpush2.bf16.msra.mxu0 0
        %1796 = vmatprep.subr.bf16.mxu0 0
        %1797 = vmatpush2.bf16.msra.mxu0 0
        %1798 = vmatprep.subr.bf16.mxu0 0
        %1799 = vmatpush2.bf16.msra.mxu0 0
        %1800 = vmatprep.subr.bf16.mxu0 0
        %1801 = vmatpush2.bf16.msra.mxu0 0
        %1802 = vmatprep.subr.bf16.mxu0 0
        %1803 = vmatpush2.bf16.msra.mxu0 0
        %1804 = vmatprep.subr.bf16.mxu0 0
        %1805 = vmatpush2.bf16.msra.mxu0 0
        %1806 = vmatprep.subr.bf16.mxu0 0
        %1807 = vmatpush2.bf16.msra.mxu0 0
        %1808 = vmatprep.subr.bf16.mxu0 0
        %1809 = vmatpush2.bf16.msra.mxu0 0
        %1810 = vmatprep.mubr.bf16.mxu0 0
        %1811 = vmatmul.mubr.bf16.gmra.mxu0 %v1776
        %v1812 = vpop.f32.mrf.mxu0
        %v1813 = vadd.f32 %v1761, %v1812
        %v1814 = vpop.f32.mrf.mxu0
        %v1815 = vpop.f32.mrf.mxu0
        %v1816 = vpop.f32.mrf.mxu0
        %1817 = vdwg.mxu0
        %v1818 = vmul.f32 %v1813, 0.5
        %v1819 = vmul.f32 %v1813, 0.70710677
        %v1820 = verf.f32.pop %v1819
        %v1821 = vadd.f32 %v1820, 1.0
        %v1822 = vmul.f32 %v1818, %v1821
        %v1823 = vpack.c.bf16 %v1822, %v1822
        %v1824 = vld [vmem:[#allocation20] sm:$0xf]
        %v1825 = vld [vmem:[#allocation20 + $0x4] sm:$0xf]
        %v1826 = vld [vmem:[#allocation20 + $0x8] sm:$0xf]
        %v1827 = vld [vmem:[#allocation20 + $0xc] sm:$0xf]
        %v1828 = vld [vmem:[%s15] sm:$0x1]
        %v1830 = vlaneseq
        %v1831 = vshrl.u32 %v1830, 7
        %v1832 = vsub.s32 0, %v1831
        %v1833 = vrot.slane %v1828, %v1832
        %v1839 = vunpack.c.l.b16 %v1824
        %v1840 = vunpack.c.l.b16 %v1825
        %v1841 = vunpack.c.l.b16 %v1826
        %v1842 = vunpack.c.l.b16 %v1827
        %v1843 = vpack.c.b16 %v1840, %v1839
        %v1844 = vpack.c.b16 %v1842, %v1841
        %v1848 = vsel %vm736, %v1823, 0
        %1850 = vmatprep.subr.bf16.mxu0 0
        %1851 = vmatpush1.bf16.msra.mxu0 0
        %1852 = vmatprep.subr.bf16.mxu0 0
        %1853 = vmatpush1.bf16.msra.mxu0 0
        %1854 = vmatprep.subr.bf16.mxu0 0
        %1855 = vmatpush1.bf16.msra.mxu0 0
        %1856 = vmatprep.subr.bf16.mxu0 0
        %1857 = vmatpush1.bf16.msra.mxu0 0
        %1858 = vmatprep.subr.bf16.mxu0 0
        %1859 = vmatpush1.bf16.msra.mxu0 0
        %1860 = vmatprep.subr.bf16.mxu0 0
        %1861 = vmatpush1.bf16.msra.mxu0 0
        %1862 = vmatprep.subr.bf16.mxu0 0
        %1863 = vmatpush1.bf16.msra.mxu0 %v1844
        %1864 = vmatprep.subr.bf16.mxu0 0
        %1865 = vmatpush1.bf16.msra.mxu0 %v1843
        %1866 = vmatprep.subr.bf16.mxu0 0
        %1867 = vmatpush2.bf16.msra.mxu0 0
        %1868 = vmatprep.subr.bf16.mxu0 0
        %1869 = vmatpush2.bf16.msra.mxu0 0
        %1870 = vmatprep.subr.bf16.mxu0 0
        %1871 = vmatpush2.bf16.msra.mxu0 0
        %1872 = vmatprep.subr.bf16.mxu0 0
        %1873 = vmatpush2.bf16.msra.mxu0 0
        %1874 = vmatprep.subr.bf16.mxu0 0
        %1875 = vmatpush2.bf16.msra.mxu0 0
        %1876 = vmatprep.subr.bf16.mxu0 0
        %1877 = vmatpush2.bf16.msra.mxu0 0
        %1878 = vmatprep.subr.bf16.mxu0 0
        %1879 = vmatpush2.bf16.msra.mxu0 0
        %1880 = vmatprep.subr.bf16.mxu0 0
        %1881 = vmatpush2.bf16.msra.mxu0 0
        %1882 = vmatprep.mubr.bf16.mxu0 0
        %1883 = vmatmul.mubr.bf16.gmra.mxu0 %v1848
        %v1884 = vpop.f32.mrf.mxu0
        %v1885 = vadd.f32 %v1833, %v1884
        %v1886 = vpop.f32.mrf.mxu0
        %v1887 = vpop.f32.mrf.mxu0
        %v1888 = vpop.f32.mrf.mxu0
        %1889 = vdwg.mxu0
        %v1890 = vadd.f32 %v1885, %v1735
        %1891 = vst.msk [vmem:[%s729] sm:$0xff] %vm736, %v1890
        %s1892 = sand.u32 %s411, 1
        %s1893 = scalar_lea.sflag [#allocation4], %s1892
        %s1894 = sand.u32 %s411, 1
        %s1895 = smul.addr %s1894, 8
        %s1896 = scalar_lea.vmem [#allocation22], %s1895
        // Predicated region
        $region133: #{encoder_forward.1} parent=83 // pred_check
          %p1897 = pneg %p421
        $region134: #{encoder_forward.1} parent=83 // pred_check_branch
          %1899 = sbr.rel (%p1897) target = $region136
        $region135: #{encoder_forward.1} parent=83 // pred_region
          %s1901 = ssub.s32 128, 128
          %1902 = vsyncadd %s1893, %s1901
          %s1903 = smul.addr %s45, 2
          %s1904 = sadd.s32 %s46, %s1903
          %s1905 = smul.addr %s1904, 128
          %s1906 = scalar_lea.hbm %s16, %s1905
          %s1908 = sshll.u32 %s1896, 4
          %s1909 = int_to_ptr.vmem [resolvable:$true] %s1908
          %1911 = dma.vmem_to_hbm [thread:$0]  %s1909, 128, %s1906, %s1893
        $region136: #{encoder_forward.1} parent=83 // pred_fallthru
          _
      $region84: #{encoder_forward.1} parent=5 // pred_fallthru
        _
      %p1912 = scmp.le.s32.totalorder 2, %s36
      // Predicated region
      $region137: #{encoder_forward.1} parent=5 // pred_check
        %p1913 = pneg %p1912
      $region138: #{encoder_forward.1} parent=5 // pred_check_branch
        %1915 = sbr.rel (%p1913) target = $region140
      $region139: #{encoder_forward.1} parent=5 // pred_region
        %s1916 = ssub.s32 %s36, 2
        // Predicated region
        $region141: #{encoder_forward.1} parent=139 // pred_check
          %p1917 = pneg %p427
        $region142: #{encoder_forward.1} parent=139 // pred_check_branch
          %1919 = sbr.rel (%p1917) target = $region144
        $region143: #{encoder_forward.1} parent=139 // pred_region
          %s1920 = sand.u32 %s412, 1
          %s1921 = scalar_lea.sflag [#allocation4], %s1920
          %s1922 = sand.u32 %s412, 1
          %s1923 = smul.addr %s1922, 8
          %s1924 = scalar_lea.vmem [#allocation22], %s1923
          %1925 = dma.done %s1921, 128
        $region144: #{encoder_forward.1} parent=139 // pred_fallthru
          _
      $region140: #{encoder_forward.1} parent=5 // pred_fallthru
        _
    $region6: #{encoder_forward.1} parent=1 // loop_footer
      %s40 = sadd.s32 1, %s36
    $region7: #{encoder_forward.1} parent=1 // loop_footer_branch
      %35 = sbr.rel target = $region3
    $region8: #{encoder_forward.1} parent=1 // loop_exit
      _
    %1926 = vsyncpa [#allocation3], 1
    %s1927 = scalar_lea.sflag [#allocation3], 1
    %1928 = vsyncpa %s1927, 1
    %1929 = vsyncpa [#allocation6], 1
    %s1930 = scalar_lea.sflag [#allocation6], 1
    %1931 = vsyncpa %s1930, 1
    %1932 = vsyncpa [#allocation9], 1
    %1933 = vsyncpa [#allocation12], 1
    %1934 = vsyncpa [#allocation15], 1
    %1935 = vsyncpa [#allocation18], 1
    %1936 = vsyncpa [#allocation21], 1
    %1937 = vsyncpa [#allocation4], 1
    %s1938 = scalar_lea.sflag [#allocation4], 1
    %1939 = vsyncpa %s1938, 1

</llo_original>
